<compile_context>
chip_gen: v7x
topology: tpu7x:2x2x1
jax: 0.10.0
libtpu: 0.0.40
codegen_flags: <defaults>
</compile_context>

<pallas_src>
import functools

import jax
import jax.numpy as jnp
from jax.experimental import pallas as pl
from jax.experimental.pallas import tpu as pltpu

NUM_CLASSES = 10
H1 = 512
H2 = 256
OUT = 1


def _leaky_relu(x, slope=0.2):
    return jnp.where(x > 0, x, slope * x)


def discriminator_kernel(xT_ref, w1_ref, b1_ref, w2_ref, b2_ref, w3_ref,
                         b3_ref, o_ref):
    """Feature-major / batch-on-lane fused MLP.

    xT_ref : (NUM_CLASSES, bb) bf16  -- batch rides the 128-lane axis
    w*_ref : PyTorch (out, in) layout, pre-cast to bf16 in the wrapper
    b1/b2  : (out, 1); their dtype selects the epilogue precision
             (bf16 on v6e/v7x, f32 on v5e which has no bf16 VPU)
    o_ref  : (1, bb) f32             -- lane-dense output block
    """
    # Layer 1: (512, 10) @ (10, bb) -> (512, bb), f32 accumulation on the MXU.
    h1 = jnp.dot(w1_ref[...], xT_ref[...], preferred_element_type=jnp.float32)
    h1 = _leaky_relu(h1.astype(b1_ref.dtype) + b1_ref[...]).astype(jnp.bfloat16)

    # Layer 2: (256, 512) @ (512, bb) -> (256, bb).
    h2 = jnp.dot(w2_ref[...], h1, preferred_element_type=jnp.float32)
    h2 = _leaky_relu(h2.astype(b2_ref.dtype) + b2_ref[...]).astype(jnp.bfloat16)

    # Layer 3: (1, 256) @ (256, bb) -> (1, bb); batch already on the lane axis
    # so the store is an unmasked, lane-dense vst.
    h3 = jnp.dot(w3_ref[...], h2, preferred_element_type=jnp.float32)
    h3 = h3 + b3_ref[...]

    # Numerically-stable sigmoid; exp and approx reciprocal both hit the EUP.
    z = jnp.exp(-jnp.abs(h3))
    inv = pl.reciprocal(1.0 + z, approx=True)
    o_ref[...] = jnp.where(h3 >= 0.0, inv, z * inv).astype(o_ref.dtype)


def _round_up(n, m):
    return ((n + m - 1) // m) * m


@functools.partial(jax.jit, static_argnames=("block_b", "bf16_epilogue"))
def _discriminator_forward_impl(x, params, block_b, bf16_epilogue):
    w1, b1, w2, b2, w3, b3 = params
    B = x.shape[0]

    # Batch tile (lane axis), multiple of 128.  For B <= block_b use a single
    # block sized to the batch -- no fabricated second block (v5e/v6e have a
    # single TensorCore; an extra padded block is pure serial waste).
    bb = max(128, (int(block_b) // 128) * 128)
    if B <= bb:
        bb = max(128, _round_up(B, 128))
        n_blocks = 1
    else:
        n_blocks = pl.cdiv(B, bb)
    B_pad = n_blocks * bb

    # Batch-on-lane input: x^T, cast to bf16 once (halves x DMA bytes) and
    # zero-padded to the block multiple.  Padded columns produce garbage that
    # is sliced off below.
    # TODO(synk): for very large B, handle the ragged tail in-kernel (row mask
    # / pl.BoundedSlice) instead of materializing the padded copy of x.
    xT = jnp.pad(x.astype(jnp.bfloat16).T, ((0, 0), (0, B_pad - B)))

    # Pre-cast the grid-constant weights to bf16 once in the wrapper so the
    # kernel performs no per-step weight casts.
    ep_dtype = jnp.bfloat16 if bf16_epilogue else jnp.float32
    w1c = w1.astype(jnp.bfloat16)                  # (512, 10)
    w2c = w2.astype(jnp.bfloat16)                  # (256, 512)
    w3c = w3.astype(jnp.bfloat16)                  # (1, 256)
    b1c = b1.reshape(H1, 1).astype(ep_dtype)
    b2c = b2.reshape(H2, 1).astype(ep_dtype)
    b3c = b3.reshape(1, 1).astype(jnp.float32)     # final sigmoid stays f32

    # Weight/bias blocks are constant across the grid.  pipeline_mode=
    # pl.Buffered(1) would single-buffer them; omitted for portability since
    # the total bf16 footprint is < 0.5 MiB.
    const = lambda shape: pl.BlockSpec(shape, lambda i: (0, 0))

    out = pl.pallas_call(
        discriminator_kernel,
        out_shape=jax.ShapeDtypeStruct((1, B_pad), jnp.float32),
        grid_spec=pltpu.PrefetchScalarGridSpec(
            num_scalar_prefetch=0,
            grid=(n_blocks,),
            in_specs=[
                pl.BlockSpec((NUM_CLASSES, bb), lambda i: (0, i)),  # x^T tile
                const((H1, NUM_CLASSES)),   # w1 (out, in)
                const((H1, 1)),             # b1
                const((H2, H1)),            # w2 (out, in)
                const((H2, 1)),             # b2
                const((OUT, H2)),           # w3 (out, in) = (1, 256)
                const((1, 1)),              # b3
            ],
            out_specs=pl.BlockSpec((1, bb), lambda i: (0, i)),      # lane-dense
        ),
        compiler_params=pltpu.CompilerParams(
            dimension_semantics=("parallel",)),   # megacore-shardable on v7x
    )(xT, w1c, b1c, w2c, b2c, w3c, b3c)

    return out[0, :B].reshape(B, OUT)


def discriminator_forward(x, params, block_b=None, bf16_epilogue=None):
    """x: (B, num_classes) f32; params in PyTorch layout; returns (B, 1) f32."""
    if block_b is None or bf16_epilogue is None:
        kind = jax.devices()[0].device_kind.lower()
        is_v5 = "v5" in kind
        if block_b is None:
            # v5e: MXU-bound sooner, no bf16 VPU -> smaller tile.
            block_b = 256 if is_v5 else 512
        if bf16_epilogue is None:
            bf16_epilogue = not is_v5
    return _discriminator_forward_impl(x, params, int(block_b),
                                       bool(bf16_epilogue))


def init_params(key):
    """nn.Linear-style U(-1/sqrt(fan_in), 1/sqrt(fan_in)) init, PyTorch layout:
    w: (out, in), b: (out,)."""
    def linear(key, fan_in, fan_out):
        kw, kb = jax.random.split(key)
        bound = 1.0 / jnp.sqrt(jnp.float32(fan_in))
        w = jax.random.uniform(kw, (fan_out, fan_in), jnp.float32, -bound, bound)
        b = jax.random.uniform(kb, (fan_out,), jnp.float32, -bound, bound)
        return w, b

    k1, k2, k3 = jax.random.split(key, 3)
    w1, b1 = linear(k1, NUM_CLASSES, H1)
    w2, b2 = linear(k2, H1, H2)
    w3, b3 = linear(k3, H2, OUT)
    return (w1, b1, w2, b2, w3, b3)


def reference_forward(x, params):
    """Pure-JAX f32 reference of the same forward pass (PyTorch convention)."""
    w1, b1, w2, b2, w3, b3 = params
    h = x @ w1.T + b1
    h = jnp.where(h > 0, h, 0.2 * h)
    h = h @ w2.T + b2
    h = jnp.where(h > 0, h, 0.2 * h)
    return jax.nn.sigmoid(h @ w3.T + b3)


if __name__ == "__main__":
    key = jax.random.PRNGKey(0)
    k_params, k_x1, k_x2 = jax.random.split(key, 3)

    params = init_params(k_params)

    # Small batch: single 128-wide lane block.
    B = 16
    logits = jax.random.normal(k_x1, (B, NUM_CLASSES), jnp.float32)
    class_probs = jax.nn.softmax(logits, axis=-1)
    validity = jax.block_until_ready(discriminator_forward(class_probs, params))
    ref = reference_forward(class_probs, params)
    assert validity.shape == (B, OUT)
    # bf16 matmul operands + approx reciprocal vs. pure-f32 reference.
    assert jnp.allclose(validity, ref, atol=1e-2, rtol=0.0), (
        float(jnp.max(jnp.abs(validity - ref))))

    # Ragged multi-block batch: exercises the parallel grid + tail padding.
    B2 = 300
    logits2 = jax.random.normal(k_x2, (B2, NUM_CLASSES), jnp.float32)
    class_probs2 = jax.nn.softmax(logits2, axis=-1)
    validity2 = jax.block_until_ready(
        discriminator_forward(class_probs2, params, block_b=128))
    ref2 = reference_forward(class_probs2, params)
    assert validity2.shape == (B2, OUT)
    assert jnp.allclose(validity2, ref2, atol=1e-2, rtol=0.0), (
        float(jnp.max(jnp.abs(validity2 - ref2))))

    print("KERNEL_OK")
</pallas_src>

<mosaic_0001>
module attributes {stable_mosaic.version = 11 : i64} {
  func.func @discriminator_kernel(%arg0: i32, %arg1: memref<10x128xbf16, #tpu.memory_space<vmem>>, %arg2: memref<512x10xbf16, #tpu.memory_space<vmem>>, %arg3: memref<512x1xbf16, #tpu.memory_space<vmem>>, %arg4: memref<256x512xbf16, #tpu.memory_space<vmem>>, %arg5: memref<256x1xbf16, #tpu.memory_space<vmem>>, %arg6: memref<1x256xbf16, #tpu.memory_space<vmem>>, %arg7: memref<1x1xf32, #tpu.memory_space<vmem>>, %arg8: memref<1x128xf32, #tpu.memory_space<vmem>>) attributes {dimension_semantics = [#tpu.dimension_semantics<parallel>], iteration_bounds = array<i64: 1>, scalar_prefetch = 0 : i64, scratch_operands = 0 : i64, tpu.core_type = #tpu.core_type<tc>, window_params = [{transform_indices = @transform_0, window_bounds = array<i64: 10, 128>}, {pipeline_mode = #tpu.pipeline_mode<synchronous>, transform_indices = @transform_1, window_bounds = array<i64: 512, 10>}, {pipeline_mode = #tpu.pipeline_mode<synchronous>, transform_indices = @transform_2, window_bounds = array<i64: 512, 1>}, {pipeline_mode = #tpu.pipeline_mode<synchronous>, transform_indices = @transform_3, window_bounds = array<i64: 256, 512>}, {pipeline_mode = #tpu.pipeline_mode<synchronous>, transform_indices = @transform_4, window_bounds = array<i64: 256, 1>}, {pipeline_mode = #tpu.pipeline_mode<synchronous>, transform_indices = @transform_5, window_bounds = array<i64: 1, 256>}, {pipeline_mode = #tpu.pipeline_mode<synchronous>, transform_indices = @transform_6, window_bounds = array<i64: 1, 1>}, {transform_indices = @transform_7, window_bounds = array<i64: 1, 128>}]} {
    %c0 = arith.constant 0 : index
    %c0_0 = arith.constant 0 : index
    %0 = vector.load %arg2[%c0, %c0_0] : memref<512x10xbf16, #tpu.memory_space<vmem>>, vector<512x10xbf16>
    %c0_1 = arith.constant 0 : index
    %c0_2 = arith.constant 0 : index
    %1 = vector.load %arg1[%c0_1, %c0_2] : memref<10x128xbf16, #tpu.memory_space<vmem>>, vector<10x128xbf16>
    %cst = arith.constant dense<0.000000e+00> : vector<512x128xf32>
    %2 = tpu.matmul %0, %1, %cst {dimension_numbers = #tpu.dot_dimension_numbers<[1], [0], [0], [1], [0, 0, 1, 1], [], []>} : vector<512x10xbf16>, vector<10x128xbf16>, vector<512x128xf32> -> vector<512x128xf32>
    %3 = arith.truncf %2 : vector<512x128xf32> to vector<512x128xbf16>
    %c0_3 = arith.constant 0 : index
    %c0_4 = arith.constant 0 : index
    %4 = vector.load %arg3[%c0_3, %c0_4] : memref<512x1xbf16, #tpu.memory_space<vmem>>, vector<512x1xbf16>
    %5 = vector.broadcast %4 : vector<512x1xbf16> to vector<512x128xbf16>
    %6 = arith.addf %3, %5 : vector<512x128xbf16>
    %cst_5 = arith.constant 0.000000e+00 : bf16
    %7 = vector.broadcast %cst_5 : bf16 to vector<512x128xbf16>
    %8 = arith.cmpf ogt, %6, %7 : vector<512x128xbf16>
    %cst_6 = arith.constant 2.001950e-01 : bf16
    %9 = vector.broadcast %cst_6 : bf16 to vector<512x128xbf16>
    %10 = arith.mulf %9, %6 : vector<512x128xbf16>
    %11 = arith.select %8, %6, %10 : vector<512x128xi1>, vector<512x128xbf16>
    %c0_7 = arith.constant 0 : index
    %c0_8 = arith.constant 0 : index
    %12 = vector.load %arg4[%c0_7, %c0_8] : memref<256x512xbf16, #tpu.memory_space<vmem>>, vector<256x512xbf16>
    %cst_9 = arith.constant dense<0.000000e+00> : vector<256x128xf32>
    %13 = tpu.matmul %12, %11, %cst_9 {dimension_numbers = #tpu.dot_dimension_numbers<[1], [0], [0], [1], [0, 0, 1, 1], [], []>} : vector<256x512xbf16>, vector<512x128xbf16>, vector<256x128xf32> -> vector<256x128xf32>
    %14 = arith.truncf %13 : vector<256x128xf32> to vector<256x128xbf16>
    %c0_10 = arith.constant 0 : index
    %c0_11 = arith.constant 0 : index
    %15 = vector.load %arg5[%c0_10, %c0_11] : memref<256x1xbf16, #tpu.memory_space<vmem>>, vector<256x1xbf16>
    %16 = vector.broadcast %15 : vector<256x1xbf16> to vector<256x128xbf16>
    %17 = arith.addf %14, %16 : vector<256x128xbf16>
    %cst_12 = arith.constant 0.000000e+00 : bf16
    %18 = vector.broadcast %cst_12 : bf16 to vector<256x128xbf16>
    %19 = arith.cmpf ogt, %17, %18 : vector<256x128xbf16>
    %cst_13 = arith.constant 2.001950e-01 : bf16
    %20 = vector.broadcast %cst_13 : bf16 to vector<256x128xbf16>
    %21 = arith.mulf %20, %17 : vector<256x128xbf16>
    %22 = arith.select %19, %17, %21 : vector<256x128xi1>, vector<256x128xbf16>
    %c0_14 = arith.constant 0 : index
    %c0_15 = arith.constant 0 : index
    %23 = vector.load %arg6[%c0_14, %c0_15] : memref<1x256xbf16, #tpu.memory_space<vmem>>, vector<1x256xbf16>
    %cst_16 = arith.constant dense<0.000000e+00> : vector<1x128xf32>
    %24 = tpu.matmul %23, %22, %cst_16 {dimension_numbers = #tpu.dot_dimension_numbers<[1], [0], [0], [1], [0, 0, 1, 1], [], []>} : vector<1x256xbf16>, vector<256x128xbf16>, vector<1x128xf32> -> vector<1x128xf32>
    %c0_17 = arith.constant 0 : index
    %c0_18 = arith.constant 0 : index
    %25 = vector.load %arg7[%c0_17, %c0_18] : memref<1x1xf32, #tpu.memory_space<vmem>>, vector<1x1xf32>
    %26 = vector.broadcast %25 : vector<1x1xf32> to vector<1x128xf32>
    %27 = arith.addf %24, %26 : vector<1x128xf32>
    %28 = math.absf %27 : vector<1x128xf32>
    %cst_19 = arith.constant 0.000000e+00 : f32
    %29 = vector.broadcast %cst_19 : f32 to vector<1x128xf32>
    %30 = arith.subf %29, %28 : vector<1x128xf32>
    %31 = math.exp %30 : vector<1x128xf32>
    %cst_20 = arith.constant 1.000000e+00 : f32
    %32 = vector.broadcast %cst_20 : f32 to vector<1x128xf32>
    %33 = arith.addf %32, %31 : vector<1x128xf32>
    %34 = tpu.reciprocal %33 {approx = true} : vector<1x128xf32> -> vector<1x128xf32>
    %cst_21 = arith.constant 0.000000e+00 : f32
    %35 = vector.broadcast %cst_21 : f32 to vector<1x128xf32>
    %36 = arith.cmpf oge, %27, %35 : vector<1x128xf32>
    %37 = arith.mulf %31, %34 : vector<1x128xf32>
    %38 = arith.select %36, %34, %37 : vector<1x128xi1>, vector<1x128xf32>
    %c0_22 = arith.constant 0 : index
    %c0_23 = arith.constant 0 : index
    %39 = vector.load %arg8[%c0_22, %c0_23] : memref<1x128xf32, #tpu.memory_space<vmem>>, vector<1x128xf32>
    tpu.vector_store %arg8[%c0_22, %c0_23], %38 {strides = array<i32>} : memref<1x128xf32, #tpu.memory_space<vmem>>, vector<1x128xf32>,
    return
  }
  func.func @transform_0(%arg0: i32) -> (i32, i32) {
    %c0_i32 = arith.constant 0 : i32
    %c0_i32_0 = arith.constant 0 : i32
    return %c0_i32, %arg0 : i32, i32
  }
  func.func @transform_1(%arg0: i32) -> (i32, i32) {
    %c0_i32 = arith.constant 0 : i32
    %c0_i32_0 = arith.constant 0 : i32
    %c0_i32_1 = arith.constant 0 : i32
    return %c0_i32, %c0_i32_0 : i32, i32
  }
  func.func @transform_2(%arg0: i32) -> (i32, i32) {
    %c0_i32 = arith.constant 0 : i32
    %c0_i32_0 = arith.constant 0 : i32
    %c0_i32_1 = arith.constant 0 : i32
    return %c0_i32, %c0_i32_0 : i32, i32
  }
  func.func @transform_3(%arg0: i32) -> (i32, i32) {
    %c0_i32 = arith.constant 0 : i32
    %c0_i32_0 = arith.constant 0 : i32
    %c0_i32_1 = arith.constant 0 : i32
    return %c0_i32, %c0_i32_0 : i32, i32
  }
  func.func @transform_4(%arg0: i32) -> (i32, i32) {
    %c0_i32 = arith.constant 0 : i32
    %c0_i32_0 = arith.constant 0 : i32
    %c0_i32_1 = arith.constant 0 : i32
    return %c0_i32, %c0_i32_0 : i32, i32
  }
  func.func @transform_5(%arg0: i32) -> (i32, i32) {
    %c0_i32 = arith.constant 0 : i32
    %c0_i32_0 = arith.constant 0 : i32
    %c0_i32_1 = arith.constant 0 : i32
    return %c0_i32, %c0_i32_0 : i32, i32
  }
  func.func @transform_6(%arg0: i32) -> (i32, i32) {
    %c0_i32 = arith.constant 0 : i32
    %c0_i32_0 = arith.constant 0 : i32
    %c0_i32_1 = arith.constant 0 : i32
    return %c0_i32, %c0_i32_0 : i32, i32
  }
  func.func @transform_7(%arg0: i32) -> (i32, i32) {
    %c0_i32 = arith.constant 0 : i32
    %c0_i32_0 = arith.constant 0 : i32
    return %c0_i32, %arg0 : i32, i32
  }
}

</mosaic_0001>

<llo_original>
// kernel: _discriminator_forward_impl.1
$region0: #{_discriminator_forward_impl.1}
  #allocation0 [shape = 'u32[]', space=smem, size = 0x4, offset = 0x4, fixed_abs, tag = 'smem constant byte address 0x4 - core index']
  #allocation1 [shape = 'u32[144,128]{1,0:T(1,128)}', space=vmem, size = 0x12000, scoped, tag = 'internal scratch']
  #allocation2 [shape = 'f32[1,1]{1,0:T(1,128)S(1)}', space=vmem, size = 0x200, scoped, tag = 'scoped memory for _discriminator_forward_impl.1']
  %s0 = inlined_call_operand.vmem [shape: bf16[10,128], index: 0, kind: input, shape index: {}]
  %s1 = inlined_call_operand.vmem [shape: bf16[512,10], index: 1, kind: input, shape index: {}]
  %s2 = inlined_call_operand.vmem [shape: bf16[512,1], index: 2, kind: input, shape index: {}]
  %s3 = inlined_call_operand.vmem [shape: bf16[256,512], index: 3, kind: input, shape index: {}]
  %s4 = inlined_call_operand.vmem [shape: bf16[256,1], index: 4, kind: input, shape index: {}]
  %s5 = inlined_call_operand.vmem [shape: bf16[1,256], index: 5, kind: input, shape index: {}]
  %s6 = inlined_call_operand.<no memory space> [shape: f32[1,1], index: 6, kind: input, shape index: {}]
  %s7 = inlined_call_operand.vmem [shape: f32[1,128], index: 7, kind: output, shape index: {}]
  %s8 = sld [smem:[#allocation0]]
  $region38: #{_discriminator_forward_impl.1} parent=0
    _
  %s10 = ssub.s32 1, %s8
  %s11 = scalar_select 0, %s10, %s8
  %v12 = vstv %s6
  %13 = vst [vmem:[#allocation2] sm:$0x1] %v12
  // Predicated region
  $region2: #{_discriminator_forward_impl.1} parent=0 // pred_check
    _
  $region3: #{_discriminator_forward_impl.1} parent=0 // pred_check_branch
    %15 = sbr.rel (0) target = $region5
  $region4: #{_discriminator_forward_impl.1} parent=0 // pred_region
    _
  $region5: #{_discriminator_forward_impl.1} parent=0 // pred_fallthru
    _
  // Predicated region
  $region6: #{_discriminator_forward_impl.1} parent=0 // pred_check
    _
  $region7: #{_discriminator_forward_impl.1} parent=0 // pred_check_branch
    %17 = sbr.rel (0) target = $region9
  $region8: #{_discriminator_forward_impl.1} parent=0 // pred_region
    _
  $region9: #{_discriminator_forward_impl.1} parent=0 // pred_fallthru
    _
  // Predicated region
  $region10: #{_discriminator_forward_impl.1} parent=0 // pred_check
    _
  $region11: #{_discriminator_forward_impl.1} parent=0 // pred_check_branch
    %19 = sbr.rel (0) target = $region13
  $region12: #{_discriminator_forward_impl.1} parent=0 // pred_region
    _
  $region13: #{_discriminator_forward_impl.1} parent=0 // pred_fallthru
    _
  // Predicated region
  $region14: #{_discriminator_forward_impl.1} parent=0 // pred_check
    _
  $region15: #{_discriminator_forward_impl.1} parent=0 // pred_check_branch
    %21 = sbr.rel (0) target = $region17
  $region16: #{_discriminator_forward_impl.1} parent=0 // pred_region
    _
  $region17: #{_discriminator_forward_impl.1} parent=0 // pred_fallthru
    _
  // Predicated region
  $region18: #{_discriminator_forward_impl.1} parent=0 // pred_check
    _
  $region19: #{_discriminator_forward_impl.1} parent=0 // pred_check_branch
    %23 = sbr.rel (0) target = $region21
  $region20: #{_discriminator_forward_impl.1} parent=0 // pred_region
    _
  $region21: #{_discriminator_forward_impl.1} parent=0 // pred_fallthru
    _
  // Predicated region
  $region22: #{_discriminator_forward_impl.1} parent=0 // pred_check
    _
  $region23: #{_discriminator_forward_impl.1} parent=0 // pred_check_branch
    %25 = sbr.rel (0) target = $region25
  $region24: #{_discriminator_forward_impl.1} parent=0 // pred_region
    _
  $region25: #{_discriminator_forward_impl.1} parent=0 // pred_fallthru
    _
  // Predicated region
  $region26: #{_discriminator_forward_impl.1} parent=0 // pred_check
    _
  $region27: #{_discriminator_forward_impl.1} parent=0 // pred_check_branch
    %27 = sbr.rel (0) target = $region29
  $region28: #{_discriminator_forward_impl.1} parent=0 // pred_region
    _
  $region29: #{_discriminator_forward_impl.1} parent=0 // pred_fallthru
    _
  %v30 = vld [vmem:[%s1] sm:$0xf]
  %v31 = vld [vmem:[%s1 + $0x4] sm:$0xf]
  %v32 = vld [vmem:[%s1 + $0x8] sm:$0xf]
  %v33 = vld [vmem:[%s1 + $0xc] sm:$0xf]
  %v34 = vld [vmem:[%s1 + $0x10] sm:$0xf]
  %v35 = vld [vmem:[%s1 + $0x14] sm:$0xf]
  %v36 = vld [vmem:[%s1 + $0x18] sm:$0xf]
  %v37 = vld [vmem:[%s1 + $0x1c] sm:$0xf]
  %v38 = vld [vmem:[%s1 + $0x20] sm:$0xf]
  %v39 = vld [vmem:[%s1 + $0x24] sm:$0xf]
  %v40 = vld [vmem:[%s1 + $0x28] sm:$0xf]
  %v41 = vld [vmem:[%s1 + $0x2c] sm:$0xf]
  %v42 = vld [vmem:[%s1 + $0x30] sm:$0xf]
  %v43 = vld [vmem:[%s1 + $0x34] sm:$0xf]
  %v44 = vld [vmem:[%s1 + $0x38] sm:$0xf]
  %v45 = vld [vmem:[%s1 + $0x3c] sm:$0xf]
  %v46 = vld [vmem:[%s1 + $0x40] sm:$0xf]
  %v47 = vld [vmem:[%s1 + $0x44] sm:$0xf]
  %v48 = vld [vmem:[%s1 + $0x48] sm:$0xf]
  %v49 = vld [vmem:[%s1 + $0x4c] sm:$0xf]
  %v50 = vld [vmem:[%s1 + $0x50] sm:$0xf]
  %v51 = vld [vmem:[%s1 + $0x54] sm:$0xf]
  %v52 = vld [vmem:[%s1 + $0x58] sm:$0xf]
  %v53 = vld [vmem:[%s1 + $0x5c] sm:$0xf]
  %v54 = vld [vmem:[%s1 + $0x60] sm:$0xf]
  %v55 = vld [vmem:[%s1 + $0x64] sm:$0xf]
  %v56 = vld [vmem:[%s1 + $0x68] sm:$0xf]
  %v57 = vld [vmem:[%s1 + $0x6c] sm:$0xf]
  %v58 = vld [vmem:[%s1 + $0x70] sm:$0xf]
  %v59 = vld [vmem:[%s1 + $0x74] sm:$0xf]
  %v60 = vld [vmem:[%s1 + $0x78] sm:$0xf]
  %v61 = vld [vmem:[%s1 + $0x7c] sm:$0xf]
  %v62 = vld [vmem:[%s1 + $0x80] sm:$0xf]
  %v63 = vld [vmem:[%s1 + $0x84] sm:$0xf]
  %v64 = vld [vmem:[%s1 + $0x88] sm:$0xf]
  %v65 = vld [vmem:[%s1 + $0x8c] sm:$0xf]
  %v66 = vld [vmem:[%s1 + $0x90] sm:$0xf]
  %v67 = vld [vmem:[%s1 + $0x94] sm:$0xf]
  %v68 = vld [vmem:[%s1 + $0x98] sm:$0xf]
  %v69 = vld [vmem:[%s1 + $0x9c] sm:$0xf]
  %v70 = vld [vmem:[%s1 + $0xa0] sm:$0xf]
  %v71 = vld [vmem:[%s1 + $0xa4] sm:$0xf]
  %v72 = vld [vmem:[%s1 + $0xa8] sm:$0xf]
  %v73 = vld [vmem:[%s1 + $0xac] sm:$0xf]
  %v74 = vld [vmem:[%s1 + $0xb0] sm:$0xf]
  %v75 = vld [vmem:[%s1 + $0xb4] sm:$0xf]
  %v76 = vld [vmem:[%s1 + $0xb8] sm:$0xf]
  %v77 = vld [vmem:[%s1 + $0xbc] sm:$0xf]
  %v78 = vld [vmem:[%s1 + $0xc0] sm:$0xf]
  %v79 = vld [vmem:[%s1 + $0xc4] sm:$0xf]
  %v80 = vld [vmem:[%s1 + $0xc8] sm:$0xf]
  %v81 = vld [vmem:[%s1 + $0xcc] sm:$0xf]
  %v82 = vld [vmem:[%s1 + $0xd0] sm:$0xf]
  %v83 = vld [vmem:[%s1 + $0xd4] sm:$0xf]
  %v84 = vld [vmem:[%s1 + $0xd8] sm:$0xf]
  %v85 = vld [vmem:[%s1 + $0xdc] sm:$0xf]
  %v86 = vld [vmem:[%s1 + $0xe0] sm:$0xf]
  %v87 = vld [vmem:[%s1 + $0xe4] sm:$0xf]
  %v88 = vld [vmem:[%s1 + $0xe8] sm:$0xf]
  %v89 = vld [vmem:[%s1 + $0xec] sm:$0xf]
  %v90 = vld [vmem:[%s1 + $0xf0] sm:$0xf]
  %v91 = vld [vmem:[%s1 + $0xf4] sm:$0xf]
  %v92 = vld [vmem:[%s1 + $0xf8] sm:$0xf]
  %v93 = vld [vmem:[%s1 + $0xfc] sm:$0xf]
  %v94 = vld [vmem:[%s0] sm:$0xf]
  %v95 = vld [vmem:[%s0 + $0x4] sm:$0x1]
  %v160 = vunpack.c.l.b16 %v30
  %v161 = vunpack.c.l.b16 %v31
  %v162 = vunpack.c.l.b16 %v32
  %v163 = vunpack.c.l.b16 %v33
  %v164 = vunpack.c.l.b16 %v34
  %v165 = vunpack.c.l.b16 %v35
  %v166 = vunpack.c.l.b16 %v36
  %v167 = vunpack.c.l.b16 %v37
  %v168 = vunpack.c.l.b16 %v38
  %v169 = vunpack.c.l.b16 %v39
  %v170 = vunpack.c.l.b16 %v40
  %v171 = vunpack.c.l.b16 %v41
  %v172 = vunpack.c.l.b16 %v42
  %v173 = vunpack.c.l.b16 %v43
  %v174 = vunpack.c.l.b16 %v44
  %v175 = vunpack.c.l.b16 %v45
  %v176 = vunpack.c.l.b16 %v46
  %v177 = vunpack.c.l.b16 %v47
  %v178 = vunpack.c.l.b16 %v48
  %v179 = vunpack.c.l.b16 %v49
  %v180 = vunpack.c.l.b16 %v50
  %v181 = vunpack.c.l.b16 %v51
  %v182 = vunpack.c.l.b16 %v52
  %v183 = vunpack.c.l.b16 %v53
  %v184 = vunpack.c.l.b16 %v54
  %v185 = vunpack.c.l.b16 %v55
  %v186 = vunpack.c.l.b16 %v56
  %v187 = vunpack.c.l.b16 %v57
  %v188 = vunpack.c.l.b16 %v58
  %v189 = vunpack.c.l.b16 %v59
  %v190 = vunpack.c.l.b16 %v60
  %v191 = vunpack.c.l.b16 %v61
  %v192 = vunpack.c.l.b16 %v62
  %v193 = vunpack.c.l.b16 %v63
  %v194 = vunpack.c.l.b16 %v64
  %v195 = vunpack.c.l.b16 %v65
  %v196 = vunpack.c.l.b16 %v66
  %v197 = vunpack.c.l.b16 %v67
  %v198 = vunpack.c.l.b16 %v68
  %v199 = vunpack.c.l.b16 %v69
  %v200 = vunpack.c.l.b16 %v70
  %v201 = vunpack.c.l.b16 %v71
  %v202 = vunpack.c.l.b16 %v72
  %v203 = vunpack.c.l.b16 %v73
  %v204 = vunpack.c.l.b16 %v74
  %v205 = vunpack.c.l.b16 %v75
  %v206 = vunpack.c.l.b16 %v76
  %v207 = vunpack.c.l.b16 %v77
  %v208 = vunpack.c.l.b16 %v78
  %v209 = vunpack.c.l.b16 %v79
  %v210 = vunpack.c.l.b16 %v80
  %v211 = vunpack.c.l.b16 %v81
  %v212 = vunpack.c.l.b16 %v82
  %v213 = vunpack.c.l.b16 %v83
  %v214 = vunpack.c.l.b16 %v84
  %v215 = vunpack.c.l.b16 %v85
  %v216 = vunpack.c.l.b16 %v86
  %v217 = vunpack.c.l.b16 %v87
  %v218 = vunpack.c.l.b16 %v88
  %v219 = vunpack.c.l.b16 %v89
  %v220 = vunpack.c.l.b16 %v90
  %v221 = vunpack.c.l.b16 %v91
  %v222 = vunpack.c.l.b16 %v92
  %v223 = vunpack.c.l.b16 %v93
  %v224 = vpack.c.b16 %v161, %v160
  %v225 = vpack.c.b16 %v163, %v162
  %v226 = vpack.c.b16 %v165, %v164
  %v227 = vpack.c.b16 %v167, %v166
  %v228 = vpack.c.b16 %v169, %v168
  %v229 = vpack.c.b16 %v171, %v170
  %v230 = vpack.c.b16 %v173, %v172
  %v231 = vpack.c.b16 %v175, %v174
  %v232 = vpack.c.b16 %v177, %v176
  %v233 = vpack.c.b16 %v179, %v178
  %v234 = vpack.c.b16 %v181, %v180
  %v235 = vpack.c.b16 %v183, %v182
  %v236 = vpack.c.b16 %v185, %v184
  %v237 = vpack.c.b16 %v187, %v186
  %v238 = vpack.c.b16 %v189, %v188
  %v239 = vpack.c.b16 %v191, %v190
  %v240 = vpack.c.b16 %v193, %v192
  %v241 = vpack.c.b16 %v195, %v194
  %v242 = vpack.c.b16 %v197, %v196
  %v243 = vpack.c.b16 %v199, %v198
  %v244 = vpack.c.b16 %v201, %v200
  %v245 = vpack.c.b16 %v203, %v202
  %v246 = vpack.c.b16 %v205, %v204
  %v247 = vpack.c.b16 %v207, %v206
  %v248 = vpack.c.b16 %v209, %v208
  %v249 = vpack.c.b16 %v211, %v210
  %v250 = vpack.c.b16 %v213, %v212
  %v251 = vpack.c.b16 %v215, %v214
  %v252 = vpack.c.b16 %v217, %v216
  %v253 = vpack.c.b16 %v219, %v218
  %v254 = vpack.c.b16 %v221, %v220
  %v255 = vpack.c.b16 %v223, %v222
  %v258 = vunpack.c.l.b16 %v94
  %v259 = vunpack.c.l.b16 %v95
  %v260 = vpack.c.b16 %v259, %v258
  %vm261 = vcmask 80896
  %v263 = vsel %vm261, %v224, 0
  %v266 = vsel %vm261, %v225, 0
  %v269 = vsel %vm261, %v226, 0
  %v272 = vsel %vm261, %v227, 0
  %v275 = vsel %vm261, %v228, 0
  %v278 = vsel %vm261, %v229, 0
  %v281 = vsel %vm261, %v230, 0
  %v284 = vsel %vm261, %v231, 0
  %v287 = vsel %vm261, %v232, 0
  %v290 = vsel %vm261, %v233, 0
  %v293 = vsel %vm261, %v234, 0
  %v296 = vsel %vm261, %v235, 0
  %v299 = vsel %vm261, %v236, 0
  %v302 = vsel %vm261, %v237, 0
  %v305 = vsel %vm261, %v238, 0
  %v308 = vsel %vm261, %v239, 0
  %v311 = vsel %vm261, %v240, 0
  %v314 = vsel %vm261, %v241, 0
  %v317 = vsel %vm261, %v242, 0
  %v320 = vsel %vm261, %v243, 0
  %v323 = vsel %vm261, %v244, 0
  %v326 = vsel %vm261, %v245, 0
  %v329 = vsel %vm261, %v246, 0
  %v332 = vsel %vm261, %v247, 0
  %v335 = vsel %vm261, %v248, 0
  %v338 = vsel %vm261, %v249, 0
  %v341 = vsel %vm261, %v250, 0
  %v344 = vsel %vm261, %v251, 0
  %v347 = vsel %vm261, %v252, 0
  %v350 = vsel %vm261, %v253, 0
  %v353 = vsel %vm261, %v254, 0
  %v356 = vsel %vm261, %v255, 0
  %vm358 = vcmask 1044480
  %v360 = vsel %vm358, %v260, 0
  %362 = vmatprep.subr.bf16.mxu0 0
  %363 = vmatpush1.bf16.msra.mxu0 %v360
  %364 = vmatprep.subr.bf16.mxu0 0
  %365 = vmatpush1.bf16.msra.mxu0 0
  %366 = vmatprep.subr.bf16.mxu0 0
  %367 = vmatpush1.bf16.msra.mxu0 0
  %368 = vmatprep.subr.bf16.mxu0 0
  %369 = vmatpush1.bf16.msra.mxu0 0
  %370 = vmatprep.subr.bf16.mxu0 0
  %371 = vmatpush1.bf16.msra.mxu0 0
  %372 = vmatprep.subr.bf16.mxu0 0
  %373 = vmatpush1.bf16.msra.mxu0 0
  %374 = vmatprep.subr.bf16.mxu0 0
  %375 = vmatpush1.bf16.msra.mxu0 0
  %376 = vmatprep.subr.bf16.mxu0 0
  %377 = vmatpush1.bf16.msra.mxu0 0
  %378 = vmatprep.subr.bf16.mxu0 0
  %379 = vmatpush1.bf16.msra.mxu0 0
  %380 = vmatprep.subr.bf16.mxu0 0
  %381 = vmatpush1.bf16.msra.mxu0 0
  %382 = vmatprep.subr.bf16.mxu0 0
  %383 = vmatpush1.bf16.msra.mxu0 0
  %384 = vmatprep.subr.bf16.mxu0 0
  %385 = vmatpush1.bf16.msra.mxu0 0
  %386 = vmatprep.subr.bf16.mxu0 0
  %387 = vmatpush1.bf16.msra.mxu0 0
  %388 = vmatprep.subr.bf16.mxu0 0
  %389 = vmatpush1.bf16.msra.mxu0 0
  %390 = vmatprep.subr.bf16.mxu0 0
  %391 = vmatpush1.bf16.msra.mxu0 0
  %392 = vmatprep.subr.bf16.mxu0 0
  %393 = vmatpush1.bf16.msra.mxu0 0
  %394 = vmatprep.mubr.bf16.mxu0 0
  %395 = vmatmul.mubr.bf16.gmra.mrb[0].mxu0 %v263
  %v396 = vpop.f32.mrb[0].mxu0
  %v397 = vadd.f32 0.0, %v396
  %v398 = vpop.f32.mrb[0].mxu0
  %v399 = vpop.f32.mrb[0].mxu0
  %v400 = vadd.f32 0.0, %v399
  %v401 = vpop.f32.mrb[0].mxu0
  %402 = vmatprep.mubr.bf16.mxu0 0
  %403 = vmatmul.mubr.bf16.gmra.mrb[0].mxu0 %v266
  %v404 = vpop.f32.mrb[0].mxu0
  %v405 = vadd.f32 0.0, %v404
  %v406 = vpop.f32.mrb[0].mxu0
  %v407 = vpop.f32.mrb[0].mxu0
  %v408 = vadd.f32 0.0, %v407
  %v409 = vpop.f32.mrb[0].mxu0
  %410 = vmatprep.mubr.bf16.mxu0 0
  %411 = vmatmul.mubr.bf16.gmra.mrb[0].mxu0 %v269
  %v412 = vpop.f32.mrb[0].mxu0
  %v413 = vadd.f32 0.0, %v412
  %v414 = vpop.f32.mrb[0].mxu0
  %v415 = vpop.f32.mrb[0].mxu0
  %v416 = vadd.f32 0.0, %v415
  %v417 = vpop.f32.mrb[0].mxu0
  %418 = vmatprep.mubr.bf16.mxu0 0
  %419 = vmatmul.mubr.bf16.gmra.mrb[0].mxu0 %v272
  %v420 = vpop.f32.mrb[0].mxu0
  %v421 = vadd.f32 0.0, %v420
  %v422 = vpop.f32.mrb[0].mxu0
  %v423 = vpop.f32.mrb[0].mxu0
  %v424 = vadd.f32 0.0, %v423
  %v425 = vpop.f32.mrb[0].mxu0
  %426 = vmatprep.mubr.bf16.mxu0 0
  %427 = vmatmul.mubr.bf16.gmra.mrb[0].mxu0 %v275
  %v428 = vpop.f32.mrb[0].mxu0
  %v429 = vadd.f32 0.0, %v428
  %v430 = vpop.f32.mrb[0].mxu0
  %v431 = vpop.f32.mrb[0].mxu0
  %v432 = vadd.f32 0.0, %v431
  %v433 = vpop.f32.mrb[0].mxu0
  %434 = vmatprep.mubr.bf16.mxu0 0
  %435 = vmatmul.mubr.bf16.gmra.mrb[0].mxu0 %v278
  %v436 = vpop.f32.mrb[0].mxu0
  %v437 = vadd.f32 0.0, %v436
  %v438 = vpop.f32.mrb[0].mxu0
  %v439 = vpop.f32.mrb[0].mxu0
  %v440 = vadd.f32 0.0, %v439
  %v441 = vpop.f32.mrb[0].mxu0
  %442 = vmatprep.mubr.bf16.mxu0 0
  %443 = vmatmul.mubr.bf16.gmra.mrb[0].mxu0 %v281
  %v444 = vpop.f32.mrb[0].mxu0
  %v445 = vadd.f32 0.0, %v444
  %v446 = vpop.f32.mrb[0].mxu0
  %v447 = vpop.f32.mrb[0].mxu0
  %v448 = vadd.f32 0.0, %v447
  %v449 = vpop.f32.mrb[0].mxu0
  %450 = vmatprep.mubr.bf16.mxu0 0
  %451 = vmatmul.mubr.bf16.gmra.mrb[0].mxu0 %v284
  %v452 = vpop.f32.mrb[0].mxu0
  %v453 = vadd.f32 0.0, %v452
  %v454 = vpop.f32.mrb[0].mxu0
  %v455 = vpop.f32.mrb[0].mxu0
  %v456 = vadd.f32 0.0, %v455
  %v457 = vpop.f32.mrb[0].mxu0
  %458 = vmatprep.mubr.bf16.mxu0 0
  %459 = vmatmul.mubr.bf16.gmra.mrb[0].mxu0 %v287
  %v460 = vpop.f32.mrb[0].mxu0
  %v461 = vadd.f32 0.0, %v460
  %v462 = vpop.f32.mrb[0].mxu0
  %v463 = vpop.f32.mrb[0].mxu0
  %v464 = vadd.f32 0.0, %v463
  %v465 = vpop.f32.mrb[0].mxu0
  %466 = vmatprep.mubr.bf16.mxu0 0
  %467 = vmatmul.mubr.bf16.gmra.mrb[0].mxu0 %v290
  %v468 = vpop.f32.mrb[0].mxu0
  %v469 = vadd.f32 0.0, %v468
  %v470 = vpop.f32.mrb[0].mxu0
  %v471 = vpop.f32.mrb[0].mxu0
  %v472 = vadd.f32 0.0, %v471
  %v473 = vpop.f32.mrb[0].mxu0
  %474 = vmatprep.mubr.bf16.mxu0 0
  %475 = vmatmul.mubr.bf16.gmra.mrb[0].mxu0 %v293
  %v476 = vpop.f32.mrb[0].mxu0
  %v477 = vadd.f32 0.0, %v476
  %v478 = vpop.f32.mrb[0].mxu0
  %v479 = vpop.f32.mrb[0].mxu0
  %v480 = vadd.f32 0.0, %v479
  %v481 = vpop.f32.mrb[0].mxu0
  %482 = vmatprep.mubr.bf16.mxu0 0
  %483 = vmatmul.mubr.bf16.gmra.mrb[0].mxu0 %v296
  %v484 = vpop.f32.mrb[0].mxu0
  %v485 = vadd.f32 0.0, %v484
  %v486 = vpop.f32.mrb[0].mxu0
  %v487 = vpop.f32.mrb[0].mxu0
  %v488 = vadd.f32 0.0, %v487
  %v489 = vpop.f32.mrb[0].mxu0
  %490 = vmatprep.mubr.bf16.mxu0 0
  %491 = vmatmul.mubr.bf16.gmra.mrb[0].mxu0 %v299
  %v492 = vpop.f32.mrb[0].mxu0
  %v493 = vadd.f32 0.0, %v492
  %v494 = vpop.f32.mrb[0].mxu0
  %v495 = vpop.f32.mrb[0].mxu0
  %v496 = vadd.f32 0.0, %v495
  %v497 = vpop.f32.mrb[0].mxu0
  %498 = vmatprep.mubr.bf16.mxu0 0
  %499 = vmatmul.mubr.bf16.gmra.mrb[0].mxu0 %v302
  %v500 = vpop.f32.mrb[0].mxu0
  %v501 = vadd.f32 0.0, %v500
  %v502 = vpop.f32.mrb[0].mxu0
  %v503 = vpop.f32.mrb[0].mxu0
  %v504 = vadd.f32 0.0, %v503
  %v505 = vpop.f32.mrb[0].mxu0
  %506 = vmatprep.mubr.bf16.mxu0 0
  %507 = vmatmul.mubr.bf16.gmra.mrb[0].mxu0 %v305
  %v508 = vpop.f32.mrb[0].mxu0
  %v509 = vadd.f32 0.0, %v508
  %v510 = vpop.f32.mrb[0].mxu0
  %v511 = vpop.f32.mrb[0].mxu0
  %v512 = vadd.f32 0.0, %v511
  %v513 = vpop.f32.mrb[0].mxu0
  %514 = vmatprep.mubr.bf16.mxu0 0
  %515 = vmatmul.mubr.bf16.gmra.mrb[0].mxu0 %v308
  %v516 = vpop.f32.mrb[0].mxu0
  %v517 = vadd.f32 0.0, %v516
  %v518 = vpop.f32.mrb[0].mxu0
  %v519 = vpop.f32.mrb[0].mxu0
  %v520 = vadd.f32 0.0, %v519
  %v521 = vpop.f32.mrb[0].mxu0
  %522 = vmatprep.mubr.bf16.mxu0 0
  %523 = vmatmul.mubr.bf16.gmra.mrb[0].mxu0 %v311
  %v524 = vpop.f32.mrb[0].mxu0
  %v525 = vadd.f32 0.0, %v524
  %v526 = vpop.f32.mrb[0].mxu0
  %v527 = vpop.f32.mrb[0].mxu0
  %v528 = vadd.f32 0.0, %v527
  %v529 = vpop.f32.mrb[0].mxu0
  %530 = vmatprep.mubr.bf16.mxu0 0
  %531 = vmatmul.mubr.bf16.gmra.mrb[0].mxu0 %v314
  %v532 = vpop.f32.mrb[0].mxu0
  %v533 = vadd.f32 0.0, %v532
  %v534 = vpop.f32.mrb[0].mxu0
  %v535 = vpop.f32.mrb[0].mxu0
  %v536 = vadd.f32 0.0, %v535
  %v537 = vpop.f32.mrb[0].mxu0
  %538 = vmatprep.mubr.bf16.mxu0 0
  %539 = vmatmul.mubr.bf16.gmra.mrb[0].mxu0 %v317
  %v540 = vpop.f32.mrb[0].mxu0
  %v541 = vadd.f32 0.0, %v540
  %v542 = vpop.f32.mrb[0].mxu0
  %v543 = vpop.f32.mrb[0].mxu0
  %v544 = vadd.f32 0.0, %v543
  %v545 = vpop.f32.mrb[0].mxu0
  %546 = vmatprep.mubr.bf16.mxu0 0
  %547 = vmatmul.mubr.bf16.gmra.mrb[0].mxu0 %v320
  %v548 = vpop.f32.mrb[0].mxu0
  %v549 = vadd.f32 0.0, %v548
  %v550 = vpop.f32.mrb[0].mxu0
  %v551 = vpop.f32.mrb[0].mxu0
  %v552 = vadd.f32 0.0, %v551
  %v553 = vpop.f32.mrb[0].mxu0
  %554 = vmatprep.mubr.bf16.mxu0 0
  %555 = vmatmul.mubr.bf16.gmra.mrb[0].mxu0 %v323
  %v556 = vpop.f32.mrb[0].mxu0
  %v557 = vadd.f32 0.0, %v556
  %v558 = vpop.f32.mrb[0].mxu0
  %v559 = vpop.f32.mrb[0].mxu0
  %v560 = vadd.f32 0.0, %v559
  %v561 = vpop.f32.mrb[0].mxu0
  %562 = vmatprep.mubr.bf16.mxu0 0
  %563 = vmatmul.mubr.bf16.gmra.mrb[0].mxu0 %v326
  %v564 = vpop.f32.mrb[0].mxu0
  %v565 = vadd.f32 0.0, %v564
  %v566 = vpop.f32.mrb[0].mxu0
  %v567 = vpop.f32.mrb[0].mxu0
  %v568 = vadd.f32 0.0, %v567
  %v569 = vpop.f32.mrb[0].mxu0
  %570 = vmatprep.mubr.bf16.mxu0 0
  %571 = vmatmul.mubr.bf16.gmra.mrb[0].mxu0 %v329
  %v572 = vpop.f32.mrb[0].mxu0
  %v573 = vadd.f32 0.0, %v572
  %v574 = vpop.f32.mrb[0].mxu0
  %v575 = vpop.f32.mrb[0].mxu0
  %v576 = vadd.f32 0.0, %v575
  %v577 = vpop.f32.mrb[0].mxu0
  %578 = vmatprep.mubr.bf16.mxu0 0
  %579 = vmatmul.mubr.bf16.gmra.mrb[0].mxu0 %v332
  %v580 = vpop.f32.mrb[0].mxu0
  %v581 = vadd.f32 0.0, %v580
  %v582 = vpop.f32.mrb[0].mxu0
  %v583 = vpop.f32.mrb[0].mxu0
  %v584 = vadd.f32 0.0, %v583
  %v585 = vpop.f32.mrb[0].mxu0
  %586 = vmatprep.mubr.bf16.mxu0 0
  %587 = vmatmul.mubr.bf16.gmra.mrb[0].mxu0 %v335
  %v588 = vpop.f32.mrb[0].mxu0
  %v589 = vadd.f32 0.0, %v588
  %v590 = vpop.f32.mrb[0].mxu0
  %v591 = vpop.f32.mrb[0].mxu0
  %v592 = vadd.f32 0.0, %v591
  %v593 = vpop.f32.mrb[0].mxu0
  %594 = vmatprep.mubr.bf16.mxu0 0
  %595 = vmatmul.mubr.bf16.gmra.mrb[0].mxu0 %v338
  %v596 = vpop.f32.mrb[0].mxu0
  %v597 = vadd.f32 0.0, %v596
  %v598 = vpop.f32.mrb[0].mxu0
  %v599 = vpop.f32.mrb[0].mxu0
  %v600 = vadd.f32 0.0, %v599
  %v601 = vpop.f32.mrb[0].mxu0
  %602 = vmatprep.mubr.bf16.mxu0 0
  %603 = vmatmul.mubr.bf16.gmra.mrb[0].mxu0 %v341
  %v604 = vpop.f32.mrb[0].mxu0
  %v605 = vadd.f32 0.0, %v604
  %v606 = vpop.f32.mrb[0].mxu0
  %v607 = vpop.f32.mrb[0].mxu0
  %v608 = vadd.f32 0.0, %v607
  %v609 = vpop.f32.mrb[0].mxu0
  %610 = vmatprep.mubr.bf16.mxu0 0
  %611 = vmatmul.mubr.bf16.gmra.mrb[0].mxu0 %v344
  %v612 = vpop.f32.mrb[0].mxu0
  %v613 = vadd.f32 0.0, %v612
  %v614 = vpop.f32.mrb[0].mxu0
  %v615 = vpop.f32.mrb[0].mxu0
  %v616 = vadd.f32 0.0, %v615
  %v617 = vpop.f32.mrb[0].mxu0
  %618 = vmatprep.mubr.bf16.mxu0 0
  %619 = vmatmul.mubr.bf16.gmra.mrb[0].mxu0 %v347
  %v620 = vpop.f32.mrb[0].mxu0
  %v621 = vadd.f32 0.0, %v620
  %v622 = vpop.f32.mrb[0].mxu0
  %v623 = vpop.f32.mrb[0].mxu0
  %v624 = vadd.f32 0.0, %v623
  %v625 = vpop.f32.mrb[0].mxu0
  %626 = vmatprep.mubr.bf16.mxu0 0
  %627 = vmatmul.mubr.bf16.gmra.mrb[0].mxu0 %v350
  %v628 = vpop.f32.mrb[0].mxu0
  %v629 = vadd.f32 0.0, %v628
  %v630 = vpop.f32.mrb[0].mxu0
  %v631 = vpop.f32.mrb[0].mxu0
  %v632 = vadd.f32 0.0, %v631
  %v633 = vpop.f32.mrb[0].mxu0
  %634 = vmatprep.mubr.bf16.mxu0 0
  %635 = vmatmul.mubr.bf16.gmra.mrb[0].mxu0 %v353
  %v636 = vpop.f32.mrb[0].mxu0
  %v637 = vadd.f32 0.0, %v636
  %v638 = vpop.f32.mrb[0].mxu0
  %v639 = vpop.f32.mrb[0].mxu0
  %v640 = vadd.f32 0.0, %v639
  %v641 = vpop.f32.mrb[0].mxu0
  %642 = vmatprep.mubr.bf16.mxu0 0
  %643 = vmatmul.mubr.bf16.gmra.mrb[0].mxu0 %v356
  %v644 = vpop.f32.mrb[0].mxu0
  %v645 = vadd.f32 0.0, %v644
  %v646 = vpop.f32.mrb[0].mxu0
  %v647 = vpop.f32.mrb[0].mxu0
  %v648 = vadd.f32 0.0, %v647
  %v649 = vpop.f32.mrb[0].mxu0
  %650 = vdwg.mxu0
  %v651 = vpack.c.bf16 %v400, %v397
  %v652 = vpack.c.bf16 %v408, %v405
  %v653 = vpack.c.bf16 %v416, %v413
  %v654 = vpack.c.bf16 %v424, %v421
  %v655 = vpack.c.bf16 %v432, %v429
  %v656 = vpack.c.bf16 %v440, %v437
  %v657 = vpack.c.bf16 %v448, %v445
  %v658 = vpack.c.bf16 %v456, %v453
  %v659 = vpack.c.bf16 %v464, %v461
  %v660 = vpack.c.bf16 %v472, %v469
  %v661 = vpack.c.bf16 %v480, %v477
  %v662 = vpack.c.bf16 %v488, %v485
  %v663 = vpack.c.bf16 %v496, %v493
  %v664 = vpack.c.bf16 %v504, %v501
  %v665 = vpack.c.bf16 %v512, %v509
  %v666 = vpack.c.bf16 %v520, %v517
  %v667 = vpack.c.bf16 %v528, %v525
  %v668 = vpack.c.bf16 %v536, %v533
  %v669 = vpack.c.bf16 %v544, %v541
  %v670 = vpack.c.bf16 %v552, %v549
  %v671 = vpack.c.bf16 %v560, %v557
  %v672 = vpack.c.bf16 %v568, %v565
  %v673 = vpack.c.bf16 %v576, %v573
  %v674 = vpack.c.bf16 %v584, %v581
  %v675 = vpack.c.bf16 %v592, %v589
  %v676 = vpack.c.bf16 %v600, %v597
  %v677 = vpack.c.bf16 %v608, %v605
  %v678 = vpack.c.bf16 %v616, %v613
  %v679 = vpack.c.bf16 %v624, %v621
  %v680 = vpack.c.bf16 %v632, %v629
  %v681 = vpack.c.bf16 %v640, %v637
  %v682 = vpack.c.bf16 %v648, %v645
  %v683 = vld [vmem:[%s2] sm:$0xf]
  %v684 = vld [vmem:[%s2 + $0x4] sm:$0xf]
  %v685 = vld [vmem:[%s2 + $0x8] sm:$0xf]
  %v686 = vld [vmem:[%s2 + $0xc] sm:$0xf]
  %v687 = vld [vmem:[%s2 + $0x10] sm:$0xf]
  %v688 = vld [vmem:[%s2 + $0x14] sm:$0xf]
  %v689 = vld [vmem:[%s2 + $0x18] sm:$0xf]
  %v690 = vld [vmem:[%s2 + $0x1c] sm:$0xf]
  %v691 = vld [vmem:[%s2 + $0x20] sm:$0xf]
  %v692 = vld [vmem:[%s2 + $0x24] sm:$0xf]
  %v693 = vld [vmem:[%s2 + $0x28] sm:$0xf]
  %v694 = vld [vmem:[%s2 + $0x2c] sm:$0xf]
  %v695 = vld [vmem:[%s2 + $0x30] sm:$0xf]
  %v696 = vld [vmem:[%s2 + $0x34] sm:$0xf]
  %v697 = vld [vmem:[%s2 + $0x38] sm:$0xf]
  %v698 = vld [vmem:[%s2 + $0x3c] sm:$0xf]
  %v699 = vld [vmem:[%s2 + $0x40] sm:$0xf]
  %v700 = vld [vmem:[%s2 + $0x44] sm:$0xf]
  %v701 = vld [vmem:[%s2 + $0x48] sm:$0xf]
  %v702 = vld [vmem:[%s2 + $0x4c] sm:$0xf]
  %v703 = vld [vmem:[%s2 + $0x50] sm:$0xf]
  %v704 = vld [vmem:[%s2 + $0x54] sm:$0xf]
  %v705 = vld [vmem:[%s2 + $0x58] sm:$0xf]
  %v706 = vld [vmem:[%s2 + $0x5c] sm:$0xf]
  %v707 = vld [vmem:[%s2 + $0x60] sm:$0xf]
  %v708 = vld [vmem:[%s2 + $0x64] sm:$0xf]
  %v709 = vld [vmem:[%s2 + $0x68] sm:$0xf]
  %v710 = vld [vmem:[%s2 + $0x6c] sm:$0xf]
  %v711 = vld [vmem:[%s2 + $0x70] sm:$0xf]
  %v712 = vld [vmem:[%s2 + $0x74] sm:$0xf]
  %v713 = vld [vmem:[%s2 + $0x78] sm:$0xf]
  %v714 = vld [vmem:[%s2 + $0x7c] sm:$0xf]
  %v715 = vld [vmem:[%s2 + $0x80] sm:$0xf]
  %v716 = vld [vmem:[%s2 + $0x84] sm:$0xf]
  %v717 = vld [vmem:[%s2 + $0x88] sm:$0xf]
  %v718 = vld [vmem:[%s2 + $0x8c] sm:$0xf]
  %v719 = vld [vmem:[%s2 + $0x90] sm:$0xf]
  %v720 = vld [vmem:[%s2 + $0x94] sm:$0xf]
  %v721 = vld [vmem:[%s2 + $0x98] sm:$0xf]
  %v722 = vld [vmem:[%s2 + $0x9c] sm:$0xf]
  %v723 = vld [vmem:[%s2 + $0xa0] sm:$0xf]
  %v724 = vld [vmem:[%s2 + $0xa4] sm:$0xf]
  %v725 = vld [vmem:[%s2 + $0xa8] sm:$0xf]
  %v726 = vld [vmem:[%s2 + $0xac] sm:$0xf]
  %v727 = vld [vmem:[%s2 + $0xb0] sm:$0xf]
  %v728 = vld [vmem:[%s2 + $0xb4] sm:$0xf]
  %v729 = vld [vmem:[%s2 + $0xb8] sm:$0xf]
  %v730 = vld [vmem:[%s2 + $0xbc] sm:$0xf]
  %v731 = vld [vmem:[%s2 + $0xc0] sm:$0xf]
  %v732 = vld [vmem:[%s2 + $0xc4] sm:$0xf]
  %v733 = vld [vmem:[%s2 + $0xc8] sm:$0xf]
  %v734 = vld [vmem:[%s2 + $0xcc] sm:$0xf]
  %v735 = vld [vmem:[%s2 + $0xd0] sm:$0xf]
  %v736 = vld [vmem:[%s2 + $0xd4] sm:$0xf]
  %v737 = vld [vmem:[%s2 + $0xd8] sm:$0xf]
  %v738 = vld [vmem:[%s2 + $0xdc] sm:$0xf]
  %v739 = vld [vmem:[%s2 + $0xe0] sm:$0xf]
  %v740 = vld [vmem:[%s2 + $0xe4] sm:$0xf]
  %v741 = vld [vmem:[%s2 + $0xe8] sm:$0xf]
  %v742 = vld [vmem:[%s2 + $0xec] sm:$0xf]
  %v743 = vld [vmem:[%s2 + $0xf0] sm:$0xf]
  %v744 = vld [vmem:[%s2 + $0xf4] sm:$0xf]
  %v745 = vld [vmem:[%s2 + $0xf8] sm:$0xf]
  %v746 = vld [vmem:[%s2 + $0xfc] sm:$0xf]
  %748 = vset.pattern.permute.xlu0 0
  %749 = vperm.xlu0 %748, %v683
  %v750 = vpop.permute.xlu0 %749
  %v753 = vunpack.c.l.s4 839922192
  %v754 = vunpack.c.0.s8 %v753
  %v755 = vlaneseq
  %v756 = vshrl.u32 %v755, 7
  %v757 = vsub.s32 %v754, %v756
  %v758 = vrot.slane %v750, %v757
  %760 = vset.pattern.permute.xlu0 0
  %761 = vperm.xlu0 %760, %v684
  %v762 = vpop.permute.xlu0 %761
  %v765 = vunpack.c.l.s4 839922192
  %v766 = vunpack.c.0.s8 %v765
  %v767 = vlaneseq
  %v768 = vshrl.u32 %v767, 7
  %v769 = vsub.s32 %v766, %v768
  %v770 = vrot.slane %v762, %v769
  %772 = vset.pattern.permute.xlu0 0
  %773 = vperm.xlu0 %772, %v685
  %v774 = vpop.permute.xlu0 %773
  %v777 = vunpack.c.l.s4 839922192
  %v778 = vunpack.c.0.s8 %v777
  %v779 = vlaneseq
  %v780 = vshrl.u32 %v779, 7
  %v781 = vsub.s32 %v778, %v780
  %v782 = vrot.slane %v774, %v781
  %784 = vset.pattern.permute.xlu0 0
  %785 = vperm.xlu0 %784, %v686
  %v786 = vpop.permute.xlu0 %785
  %v789 = vunpack.c.l.s4 839922192
  %v790 = vunpack.c.0.s8 %v789
  %v791 = vlaneseq
  %v792 = vshrl.u32 %v791, 7
  %v793 = vsub.s32 %v790, %v792
  %v794 = vrot.slane %v786, %v793
  %796 = vset.pattern.permute.xlu0 0
  %797 = vperm.xlu0 %796, %v687
  %v798 = vpop.permute.xlu0 %797
  %v801 = vunpack.c.l.s4 839922192
  %v802 = vunpack.c.0.s8 %v801
  %v803 = vlaneseq
  %v804 = vshrl.u32 %v803, 7
  %v805 = vsub.s32 %v802, %v804
  %v806 = vrot.slane %v798, %v805
  %808 = vset.pattern.permute.xlu0 0
  %809 = vperm.xlu0 %808, %v688
  %v810 = vpop.permute.xlu0 %809
  %v813 = vunpack.c.l.s4 839922192
  %v814 = vunpack.c.0.s8 %v813
  %v815 = vlaneseq
  %v816 = vshrl.u32 %v815, 7
  %v817 = vsub.s32 %v814, %v816
  %v818 = vrot.slane %v810, %v817
  %820 = vset.pattern.permute.xlu0 0
  %821 = vperm.xlu0 %820, %v689
  %v822 = vpop.permute.xlu0 %821
  %v825 = vunpack.c.l.s4 839922192
  %v826 = vunpack.c.0.s8 %v825
  %v827 = vlaneseq
  %v828 = vshrl.u32 %v827, 7
  %v829 = vsub.s32 %v826, %v828
  %v830 = vrot.slane %v822, %v829
  %832 = vset.pattern.permute.xlu0 0
  %833 = vperm.xlu0 %832, %v690
  %v834 = vpop.permute.xlu0 %833
  %v837 = vunpack.c.l.s4 839922192
  %v838 = vunpack.c.0.s8 %v837
  %v839 = vlaneseq
  %v840 = vshrl.u32 %v839, 7
  %v841 = vsub.s32 %v838, %v840
  %v842 = vrot.slane %v834, %v841
  %844 = vset.pattern.permute.xlu0 0
  %845 = vperm.xlu0 %844, %v691
  %v846 = vpop.permute.xlu0 %845
  %v849 = vunpack.c.l.s4 839922192
  %v850 = vunpack.c.0.s8 %v849
  %v851 = vlaneseq
  %v852 = vshrl.u32 %v851, 7
  %v853 = vsub.s32 %v850, %v852
  %v854 = vrot.slane %v846, %v853
  %856 = vset.pattern.permute.xlu0 0
  %857 = vperm.xlu0 %856, %v692
  %v858 = vpop.permute.xlu0 %857
  %v861 = vunpack.c.l.s4 839922192
  %v862 = vunpack.c.0.s8 %v861
  %v863 = vlaneseq
  %v864 = vshrl.u32 %v863, 7
  %v865 = vsub.s32 %v862, %v864
  %v866 = vrot.slane %v858, %v865
  %868 = vset.pattern.permute.xlu0 0
  %869 = vperm.xlu0 %868, %v693
  %v870 = vpop.permute.xlu0 %869
  %v873 = vunpack.c.l.s4 839922192
  %v874 = vunpack.c.0.s8 %v873
  %v875 = vlaneseq
  %v876 = vshrl.u32 %v875, 7
  %v877 = vsub.s32 %v874, %v876
  %v878 = vrot.slane %v870, %v877
  %880 = vset.pattern.permute.xlu0 0
  %881 = vperm.xlu0 %880, %v694
  %v882 = vpop.permute.xlu0 %881
  %v885 = vunpack.c.l.s4 839922192
  %v886 = vunpack.c.0.s8 %v885
  %v887 = vlaneseq
  %v888 = vshrl.u32 %v887, 7
  %v889 = vsub.s32 %v886, %v888
  %v890 = vrot.slane %v882, %v889
  %892 = vset.pattern.permute.xlu0 0
  %893 = vperm.xlu0 %892, %v695
  %v894 = vpop.permute.xlu0 %893
  %v897 = vunpack.c.l.s4 839922192
  %v898 = vunpack.c.0.s8 %v897
  %v899 = vlaneseq
  %v900 = vshrl.u32 %v899, 7
  %v901 = vsub.s32 %v898, %v900
  %v902 = vrot.slane %v894, %v901
  %904 = vset.pattern.permute.xlu0 0
  %905 = vperm.xlu0 %904, %v696
  %v906 = vpop.permute.xlu0 %905
  %v909 = vunpack.c.l.s4 839922192
  %v910 = vunpack.c.0.s8 %v909
  %v911 = vlaneseq
  %v912 = vshrl.u32 %v911, 7
  %v913 = vsub.s32 %v910, %v912
  %v914 = vrot.slane %v906, %v913
  %916 = vset.pattern.permute.xlu0 0
  %917 = vperm.xlu0 %916, %v697
  %v918 = vpop.permute.xlu0 %917
  %v921 = vunpack.c.l.s4 839922192
  %v922 = vunpack.c.0.s8 %v921
  %v923 = vlaneseq
  %v924 = vshrl.u32 %v923, 7
  %v925 = vsub.s32 %v922, %v924
  %v926 = vrot.slane %v918, %v925
  %928 = vset.pattern.permute.xlu0 0
  %929 = vperm.xlu0 %928, %v698
  %v930 = vpop.permute.xlu0 %929
  %v933 = vunpack.c.l.s4 839922192
  %v934 = vunpack.c.0.s8 %v933
  %v935 = vlaneseq
  %v936 = vshrl.u32 %v935, 7
  %v937 = vsub.s32 %v934, %v936
  %v938 = vrot.slane %v930, %v937
  %940 = vset.pattern.permute.xlu0 0
  %941 = vperm.xlu0 %940, %v699
  %v942 = vpop.permute.xlu0 %941
  %v945 = vunpack.c.l.s4 839922192
  %v946 = vunpack.c.0.s8 %v945
  %v947 = vlaneseq
  %v948 = vshrl.u32 %v947, 7
  %v949 = vsub.s32 %v946, %v948
  %v950 = vrot.slane %v942, %v949
  %952 = vset.pattern.permute.xlu0 0
  %953 = vperm.xlu0 %952, %v700
  %v954 = vpop.permute.xlu0 %953
  %v957 = vunpack.c.l.s4 839922192
  %v958 = vunpack.c.0.s8 %v957
  %v959 = vlaneseq
  %v960 = vshrl.u32 %v959, 7
  %v961 = vsub.s32 %v958, %v960
  %v962 = vrot.slane %v954, %v961
  %964 = vset.pattern.permute.xlu0 0
  %965 = vperm.xlu0 %964, %v701
  %v966 = vpop.permute.xlu0 %965
  %v969 = vunpack.c.l.s4 839922192
  %v970 = vunpack.c.0.s8 %v969
  %v971 = vlaneseq
  %v972 = vshrl.u32 %v971, 7
  %v973 = vsub.s32 %v970, %v972
  %v974 = vrot.slane %v966, %v973
  %976 = vset.pattern.permute.xlu0 0
  %977 = vperm.xlu0 %976, %v702
  %v978 = vpop.permute.xlu0 %977
  %v981 = vunpack.c.l.s4 839922192
  %v982 = vunpack.c.0.s8 %v981
  %v983 = vlaneseq
  %v984 = vshrl.u32 %v983, 7
  %v985 = vsub.s32 %v982, %v984
  %v986 = vrot.slane %v978, %v985
  %988 = vset.pattern.permute.xlu0 0
  %989 = vperm.xlu0 %988, %v703
  %v990 = vpop.permute.xlu0 %989
  %v993 = vunpack.c.l.s4 839922192
  %v994 = vunpack.c.0.s8 %v993
  %v995 = vlaneseq
  %v996 = vshrl.u32 %v995, 7
  %v997 = vsub.s32 %v994, %v996
  %v998 = vrot.slane %v990, %v997
  %1000 = vset.pattern.permute.xlu0 0
  %1001 = vperm.xlu0 %1000, %v704
  %v1002 = vpop.permute.xlu0 %1001
  %v1005 = vunpack.c.l.s4 839922192
  %v1006 = vunpack.c.0.s8 %v1005
  %v1007 = vlaneseq
  %v1008 = vshrl.u32 %v1007, 7
  %v1009 = vsub.s32 %v1006, %v1008
  %v1010 = vrot.slane %v1002, %v1009
  %1012 = vset.pattern.permute.xlu0 0
  %1013 = vperm.xlu0 %1012, %v705
  %v1014 = vpop.permute.xlu0 %1013
  %v1017 = vunpack.c.l.s4 839922192
  %v1018 = vunpack.c.0.s8 %v1017
  %v1019 = vlaneseq
  %v1020 = vshrl.u32 %v1019, 7
  %v1021 = vsub.s32 %v1018, %v1020
  %v1022 = vrot.slane %v1014, %v1021
  %1024 = vset.pattern.permute.xlu0 0
  %1025 = vperm.xlu0 %1024, %v706
  %v1026 = vpop.permute.xlu0 %1025
  %v1029 = vunpack.c.l.s4 839922192
  %v1030 = vunpack.c.0.s8 %v1029
  %v1031 = vlaneseq
  %v1032 = vshrl.u32 %v1031, 7
  %v1033 = vsub.s32 %v1030, %v1032
  %v1034 = vrot.slane %v1026, %v1033
  %1036 = vset.pattern.permute.xlu0 0
  %1037 = vperm.xlu0 %1036, %v707
  %v1038 = vpop.permute.xlu0 %1037
  %v1041 = vunpack.c.l.s4 839922192
  %v1042 = vunpack.c.0.s8 %v1041
  %v1043 = vlaneseq
  %v1044 = vshrl.u32 %v1043, 7
  %v1045 = vsub.s32 %v1042, %v1044
  %v1046 = vrot.slane %v1038, %v1045
  %1048 = vset.pattern.permute.xlu0 0
  %1049 = vperm.xlu0 %1048, %v708
  %v1050 = vpop.permute.xlu0 %1049
  %v1053 = vunpack.c.l.s4 839922192
  %v1054 = vunpack.c.0.s8 %v1053
  %v1055 = vlaneseq
  %v1056 = vshrl.u32 %v1055, 7
  %v1057 = vsub.s32 %v1054, %v1056
  %v1058 = vrot.slane %v1050, %v1057
  %1060 = vset.pattern.permute.xlu0 0
  %1061 = vperm.xlu0 %1060, %v709
  %v1062 = vpop.permute.xlu0 %1061
  %v1065 = vunpack.c.l.s4 839922192
  %v1066 = vunpack.c.0.s8 %v1065
  %v1067 = vlaneseq
  %v1068 = vshrl.u32 %v1067, 7
  %v1069 = vsub.s32 %v1066, %v1068
  %v1070 = vrot.slane %v1062, %v1069
  %1072 = vset.pattern.permute.xlu0 0
  %1073 = vperm.xlu0 %1072, %v710
  %v1074 = vpop.permute.xlu0 %1073
  %v1077 = vunpack.c.l.s4 839922192
  %v1078 = vunpack.c.0.s8 %v1077
  %v1079 = vlaneseq
  %v1080 = vshrl.u32 %v1079, 7
  %v1081 = vsub.s32 %v1078, %v1080
  %v1082 = vrot.slane %v1074, %v1081
  %1084 = vset.pattern.permute.xlu0 0
  %1085 = vperm.xlu0 %1084, %v711
  %v1086 = vpop.permute.xlu0 %1085
  %v1089 = vunpack.c.l.s4 839922192
  %v1090 = vunpack.c.0.s8 %v1089
  %v1091 = vlaneseq
  %v1092 = vshrl.u32 %v1091, 7
  %v1093 = vsub.s32 %v1090, %v1092
  %v1094 = vrot.slane %v1086, %v1093
  %1096 = vset.pattern.permute.xlu0 0
  %1097 = vperm.xlu0 %1096, %v712
  %v1098 = vpop.permute.xlu0 %1097
  %v1101 = vunpack.c.l.s4 839922192
  %v1102 = vunpack.c.0.s8 %v1101
  %v1103 = vlaneseq
  %v1104 = vshrl.u32 %v1103, 7
  %v1105 = vsub.s32 %v1102, %v1104
  %v1106 = vrot.slane %v1098, %v1105
  %1108 = vset.pattern.permute.xlu0 0
  %1109 = vperm.xlu0 %1108, %v713
  %v1110 = vpop.permute.xlu0 %1109
  %v1113 = vunpack.c.l.s4 839922192
  %v1114 = vunpack.c.0.s8 %v1113
  %v1115 = vlaneseq
  %v1116 = vshrl.u32 %v1115, 7
  %v1117 = vsub.s32 %v1114, %v1116
  %v1118 = vrot.slane %v1110, %v1117
  %1120 = vset.pattern.permute.xlu0 0
  %1121 = vperm.xlu0 %1120, %v714
  %v1122 = vpop.permute.xlu0 %1121
  %v1125 = vunpack.c.l.s4 839922192
  %v1126 = vunpack.c.0.s8 %v1125
  %v1127 = vlaneseq
  %v1128 = vshrl.u32 %v1127, 7
  %v1129 = vsub.s32 %v1126, %v1128
  %v1130 = vrot.slane %v1122, %v1129
  %1132 = vset.pattern.permute.xlu0 0
  %1133 = vperm.xlu0 %1132, %v715
  %v1134 = vpop.permute.xlu0 %1133
  %v1137 = vunpack.c.l.s4 839922192
  %v1138 = vunpack.c.0.s8 %v1137
  %v1139 = vlaneseq
  %v1140 = vshrl.u32 %v1139, 7
  %v1141 = vsub.s32 %v1138, %v1140
  %v1142 = vrot.slane %v1134, %v1141
  %1144 = vset.pattern.permute.xlu0 0
  %1145 = vperm.xlu0 %1144, %v716
  %v1146 = vpop.permute.xlu0 %1145
  %v1149 = vunpack.c.l.s4 839922192
  %v1150 = vunpack.c.0.s8 %v1149
  %v1151 = vlaneseq
  %v1152 = vshrl.u32 %v1151, 7
  %v1153 = vsub.s32 %v1150, %v1152
  %v1154 = vrot.slane %v1146, %v1153
  %1156 = vset.pattern.permute.xlu0 0
  %1157 = vperm.xlu0 %1156, %v717
  %v1158 = vpop.permute.xlu0 %1157
  %v1161 = vunpack.c.l.s4 839922192
  %v1162 = vunpack.c.0.s8 %v1161
  %v1163 = vlaneseq
  %v1164 = vshrl.u32 %v1163, 7
  %v1165 = vsub.s32 %v1162, %v1164
  %v1166 = vrot.slane %v1158, %v1165
  %1168 = vset.pattern.permute.xlu0 0
  %1169 = vperm.xlu0 %1168, %v718
  %v1170 = vpop.permute.xlu0 %1169
  %v1173 = vunpack.c.l.s4 839922192
  %v1174 = vunpack.c.0.s8 %v1173
  %v1175 = vlaneseq
  %v1176 = vshrl.u32 %v1175, 7
  %v1177 = vsub.s32 %v1174, %v1176
  %v1178 = vrot.slane %v1170, %v1177
  %1180 = vset.pattern.permute.xlu0 0
  %1181 = vperm.xlu0 %1180, %v719
  %v1182 = vpop.permute.xlu0 %1181
  %v1185 = vunpack.c.l.s4 839922192
  %v1186 = vunpack.c.0.s8 %v1185
  %v1187 = vlaneseq
  %v1188 = vshrl.u32 %v1187, 7
  %v1189 = vsub.s32 %v1186, %v1188
  %v1190 = vrot.slane %v1182, %v1189
  %1192 = vset.pattern.permute.xlu0 0
  %1193 = vperm.xlu0 %1192, %v720
  %v1194 = vpop.permute.xlu0 %1193
  %v1197 = vunpack.c.l.s4 839922192
  %v1198 = vunpack.c.0.s8 %v1197
  %v1199 = vlaneseq
  %v1200 = vshrl.u32 %v1199, 7
  %v1201 = vsub.s32 %v1198, %v1200
  %v1202 = vrot.slane %v1194, %v1201
  %1204 = vset.pattern.permute.xlu0 0
  %1205 = vperm.xlu0 %1204, %v721
  %v1206 = vpop.permute.xlu0 %1205
  %v1209 = vunpack.c.l.s4 839922192
  %v1210 = vunpack.c.0.s8 %v1209
  %v1211 = vlaneseq
  %v1212 = vshrl.u32 %v1211, 7
  %v1213 = vsub.s32 %v1210, %v1212
  %v1214 = vrot.slane %v1206, %v1213
  %1216 = vset.pattern.permute.xlu0 0
  %1217 = vperm.xlu0 %1216, %v722
  %v1218 = vpop.permute.xlu0 %1217
  %v1221 = vunpack.c.l.s4 839922192
  %v1222 = vunpack.c.0.s8 %v1221
  %v1223 = vlaneseq
  %v1224 = vshrl.u32 %v1223, 7
  %v1225 = vsub.s32 %v1222, %v1224
  %v1226 = vrot.slane %v1218, %v1225
  %1228 = vset.pattern.permute.xlu0 0
  %1229 = vperm.xlu0 %1228, %v723
  %v1230 = vpop.permute.xlu0 %1229
  %v1233 = vunpack.c.l.s4 839922192
  %v1234 = vunpack.c.0.s8 %v1233
  %v1235 = vlaneseq
  %v1236 = vshrl.u32 %v1235, 7
  %v1237 = vsub.s32 %v1234, %v1236
  %v1238 = vrot.slane %v1230, %v1237
  %1240 = vset.pattern.permute.xlu0 0
  %1241 = vperm.xlu0 %1240, %v724
  %v1242 = vpop.permute.xlu0 %1241
  %v1245 = vunpack.c.l.s4 839922192
  %v1246 = vunpack.c.0.s8 %v1245
  %v1247 = vlaneseq
  %v1248 = vshrl.u32 %v1247, 7
  %v1249 = vsub.s32 %v1246, %v1248
  %v1250 = vrot.slane %v1242, %v1249
  %1252 = vset.pattern.permute.xlu0 0
  %1253 = vperm.xlu0 %1252, %v725
  %v1254 = vpop.permute.xlu0 %1253
  %v1257 = vunpack.c.l.s4 839922192
  %v1258 = vunpack.c.0.s8 %v1257
  %v1259 = vlaneseq
  %v1260 = vshrl.u32 %v1259, 7
  %v1261 = vsub.s32 %v1258, %v1260
  %v1262 = vrot.slane %v1254, %v1261
  %1264 = vset.pattern.permute.xlu0 0
  %1265 = vperm.xlu0 %1264, %v726
  %v1266 = vpop.permute.xlu0 %1265
  %v1269 = vunpack.c.l.s4 839922192
  %v1270 = vunpack.c.0.s8 %v1269
  %v1271 = vlaneseq
  %v1272 = vshrl.u32 %v1271, 7
  %v1273 = vsub.s32 %v1270, %v1272
  %v1274 = vrot.slane %v1266, %v1273
  %1276 = vset.pattern.permute.xlu0 0
  %1277 = vperm.xlu0 %1276, %v727
  %v1278 = vpop.permute.xlu0 %1277
  %v1281 = vunpack.c.l.s4 839922192
  %v1282 = vunpack.c.0.s8 %v1281
  %v1283 = vlaneseq
  %v1284 = vshrl.u32 %v1283, 7
  %v1285 = vsub.s32 %v1282, %v1284
  %v1286 = vrot.slane %v1278, %v1285
  %1288 = vset.pattern.permute.xlu0 0
  %1289 = vperm.xlu0 %1288, %v728
  %v1290 = vpop.permute.xlu0 %1289
  %v1293 = vunpack.c.l.s4 839922192
  %v1294 = vunpack.c.0.s8 %v1293
  %v1295 = vlaneseq
  %v1296 = vshrl.u32 %v1295, 7
  %v1297 = vsub.s32 %v1294, %v1296
  %v1298 = vrot.slane %v1290, %v1297
  %1300 = vset.pattern.permute.xlu0 0
  %1301 = vperm.xlu0 %1300, %v729
  %v1302 = vpop.permute.xlu0 %1301
  %v1305 = vunpack.c.l.s4 839922192
  %v1306 = vunpack.c.0.s8 %v1305
  %v1307 = vlaneseq
  %v1308 = vshrl.u32 %v1307, 7
  %v1309 = vsub.s32 %v1306, %v1308
  %v1310 = vrot.slane %v1302, %v1309
  %1312 = vset.pattern.permute.xlu0 0
  %1313 = vperm.xlu0 %1312, %v730
  %v1314 = vpop.permute.xlu0 %1313
  %v1317 = vunpack.c.l.s4 839922192
  %v1318 = vunpack.c.0.s8 %v1317
  %v1319 = vlaneseq
  %v1320 = vshrl.u32 %v1319, 7
  %v1321 = vsub.s32 %v1318, %v1320
  %v1322 = vrot.slane %v1314, %v1321
  %1324 = vset.pattern.permute.xlu0 0
  %1325 = vperm.xlu0 %1324, %v731
  %v1326 = vpop.permute.xlu0 %1325
  %v1329 = vunpack.c.l.s4 839922192
  %v1330 = vunpack.c.0.s8 %v1329
  %v1331 = vlaneseq
  %v1332 = vshrl.u32 %v1331, 7
  %v1333 = vsub.s32 %v1330, %v1332
  %v1334 = vrot.slane %v1326, %v1333
  %1336 = vset.pattern.permute.xlu0 0
  %1337 = vperm.xlu0 %1336, %v732
  %v1338 = vpop.permute.xlu0 %1337
  %v1341 = vunpack.c.l.s4 839922192
  %v1342 = vunpack.c.0.s8 %v1341
  %v1343 = vlaneseq
  %v1344 = vshrl.u32 %v1343, 7
  %v1345 = vsub.s32 %v1342, %v1344
  %v1346 = vrot.slane %v1338, %v1345
  %1348 = vset.pattern.permute.xlu0 0
  %1349 = vperm.xlu0 %1348, %v733
  %v1350 = vpop.permute.xlu0 %1349
  %v1353 = vunpack.c.l.s4 839922192
  %v1354 = vunpack.c.0.s8 %v1353
  %v1355 = vlaneseq
  %v1356 = vshrl.u32 %v1355, 7
  %v1357 = vsub.s32 %v1354, %v1356
  %v1358 = vrot.slane %v1350, %v1357
  %1360 = vset.pattern.permute.xlu0 0
  %1361 = vperm.xlu0 %1360, %v734
  %v1362 = vpop.permute.xlu0 %1361
  %v1365 = vunpack.c.l.s4 839922192
  %v1366 = vunpack.c.0.s8 %v1365
  %v1367 = vlaneseq
  %v1368 = vshrl.u32 %v1367, 7
  %v1369 = vsub.s32 %v1366, %v1368
  %v1370 = vrot.slane %v1362, %v1369
  %1372 = vset.pattern.permute.xlu0 0
  %1373 = vperm.xlu0 %1372, %v735
  %v1374 = vpop.permute.xlu0 %1373
  %v1377 = vunpack.c.l.s4 839922192
  %v1378 = vunpack.c.0.s8 %v1377
  %v1379 = vlaneseq
  %v1380 = vshrl.u32 %v1379, 7
  %v1381 = vsub.s32 %v1378, %v1380
  %v1382 = vrot.slane %v1374, %v1381
  %1384 = vset.pattern.permute.xlu0 0
  %1385 = vperm.xlu0 %1384, %v736
  %v1386 = vpop.permute.xlu0 %1385
  %v1389 = vunpack.c.l.s4 839922192
  %v1390 = vunpack.c.0.s8 %v1389
  %v1391 = vlaneseq
  %v1392 = vshrl.u32 %v1391, 7
  %v1393 = vsub.s32 %v1390, %v1392
  %v1394 = vrot.slane %v1386, %v1393
  %1396 = vset.pattern.permute.xlu0 0
  %1397 = vperm.xlu0 %1396, %v737
  %v1398 = vpop.permute.xlu0 %1397
  %v1401 = vunpack.c.l.s4 839922192
  %v1402 = vunpack.c.0.s8 %v1401
  %v1403 = vlaneseq
  %v1404 = vshrl.u32 %v1403, 7
  %v1405 = vsub.s32 %v1402, %v1404
  %v1406 = vrot.slane %v1398, %v1405
  %1408 = vset.pattern.permute.xlu0 0
  %1409 = vperm.xlu0 %1408, %v738
  %v1410 = vpop.permute.xlu0 %1409
  %v1413 = vunpack.c.l.s4 839922192
  %v1414 = vunpack.c.0.s8 %v1413
  %v1415 = vlaneseq
  %v1416 = vshrl.u32 %v1415, 7
  %v1417 = vsub.s32 %v1414, %v1416
  %v1418 = vrot.slane %v1410, %v1417
  %1420 = vset.pattern.permute.xlu0 0
  %1421 = vperm.xlu0 %1420, %v739
  %v1422 = vpop.permute.xlu0 %1421
  %v1425 = vunpack.c.l.s4 839922192
  %v1426 = vunpack.c.0.s8 %v1425
  %v1427 = vlaneseq
  %v1428 = vshrl.u32 %v1427, 7
  %v1429 = vsub.s32 %v1426, %v1428
  %v1430 = vrot.slane %v1422, %v1429
  %1432 = vset.pattern.permute.xlu0 0
  %1433 = vperm.xlu0 %1432, %v740
  %v1434 = vpop.permute.xlu0 %1433
  %v1437 = vunpack.c.l.s4 839922192
  %v1438 = vunpack.c.0.s8 %v1437
  %v1439 = vlaneseq
  %v1440 = vshrl.u32 %v1439, 7
  %v1441 = vsub.s32 %v1438, %v1440
  %v1442 = vrot.slane %v1434, %v1441
  %1444 = vset.pattern.permute.xlu0 0
  %1445 = vperm.xlu0 %1444, %v741
  %v1446 = vpop.permute.xlu0 %1445
  %v1449 = vunpack.c.l.s4 839922192
  %v1450 = vunpack.c.0.s8 %v1449
  %v1451 = vlaneseq
  %v1452 = vshrl.u32 %v1451, 7
  %v1453 = vsub.s32 %v1450, %v1452
  %v1454 = vrot.slane %v1446, %v1453
  %1456 = vset.pattern.permute.xlu0 0
  %1457 = vperm.xlu0 %1456, %v742
  %v1458 = vpop.permute.xlu0 %1457
  %v1461 = vunpack.c.l.s4 839922192
  %v1462 = vunpack.c.0.s8 %v1461
  %v1463 = vlaneseq
  %v1464 = vshrl.u32 %v1463, 7
  %v1465 = vsub.s32 %v1462, %v1464
  %v1466 = vrot.slane %v1458, %v1465
  %1468 = vset.pattern.permute.xlu0 0
  %1469 = vperm.xlu0 %1468, %v743
  %v1470 = vpop.permute.xlu0 %1469
  %v1473 = vunpack.c.l.s4 839922192
  %v1474 = vunpack.c.0.s8 %v1473
  %v1475 = vlaneseq
  %v1476 = vshrl.u32 %v1475, 7
  %v1477 = vsub.s32 %v1474, %v1476
  %v1478 = vrot.slane %v1470, %v1477
  %1480 = vset.pattern.permute.xlu0 0
  %1481 = vperm.xlu0 %1480, %v744
  %v1482 = vpop.permute.xlu0 %1481
  %v1485 = vunpack.c.l.s4 839922192
  %v1486 = vunpack.c.0.s8 %v1485
  %v1487 = vlaneseq
  %v1488 = vshrl.u32 %v1487, 7
  %v1489 = vsub.s32 %v1486, %v1488
  %v1490 = vrot.slane %v1482, %v1489
  %1492 = vset.pattern.permute.xlu0 0
  %1493 = vperm.xlu0 %1492, %v745
  %v1494 = vpop.permute.xlu0 %1493
  %v1497 = vunpack.c.l.s4 839922192
  %v1498 = vunpack.c.0.s8 %v1497
  %v1499 = vlaneseq
  %v1500 = vshrl.u32 %v1499, 7
  %v1501 = vsub.s32 %v1498, %v1500
  %v1502 = vrot.slane %v1494, %v1501
  %1504 = vset.pattern.permute.xlu0 0
  %1505 = vperm.xlu0 %1504, %v746
  %v1506 = vpop.permute.xlu0 %1505
  %v1509 = vunpack.c.l.s4 839922192
  %v1510 = vunpack.c.0.s8 %v1509
  %v1511 = vlaneseq
  %v1512 = vshrl.u32 %v1511, 7
  %v1513 = vsub.s32 %v1510, %v1512
  %v1514 = vrot.slane %v1506, %v1513
  %v1579 = vunpack.c.l.b16 %v758
  %v1580 = vunpack.c.l.b16 %v770
  %v1581 = vunpack.c.l.b16 %v782
  %v1582 = vunpack.c.l.b16 %v794
  %v1583 = vunpack.c.l.b16 %v806
  %v1584 = vunpack.c.l.b16 %v818
  %v1585 = vunpack.c.l.b16 %v830
  %v1586 = vunpack.c.l.b16 %v842
  %v1587 = vunpack.c.l.b16 %v854
  %v1588 = vunpack.c.l.b16 %v866
  %v1589 = vunpack.c.l.b16 %v878
  %v1590 = vunpack.c.l.b16 %v890
  %v1591 = vunpack.c.l.b16 %v902
  %v1592 = vunpack.c.l.b16 %v914
  %v1593 = vunpack.c.l.b16 %v926
  %v1594 = vunpack.c.l.b16 %v938
  %v1595 = vunpack.c.l.b16 %v950
  %v1596 = vunpack.c.l.b16 %v962
  %v1597 = vunpack.c.l.b16 %v974
  %v1598 = vunpack.c.l.b16 %v986
  %v1599 = vunpack.c.l.b16 %v998
  %v1600 = vunpack.c.l.b16 %v1010
  %v1601 = vunpack.c.l.b16 %v1022
  %v1602 = vunpack.c.l.b16 %v1034
  %v1603 = vunpack.c.l.b16 %v1046
  %v1604 = vunpack.c.l.b16 %v1058
  %v1605 = vunpack.c.l.b16 %v1070
  %v1606 = vunpack.c.l.b16 %v1082
  %v1607 = vunpack.c.l.b16 %v1094
  %v1608 = vunpack.c.l.b16 %v1106
  %v1609 = vunpack.c.l.b16 %v1118
  %v1610 = vunpack.c.l.b16 %v1130
  %v1611 = vunpack.c.l.b16 %v1142
  %v1612 = vunpack.c.l.b16 %v1154
  %v1613 = vunpack.c.l.b16 %v1166
  %v1614 = vunpack.c.l.b16 %v1178
  %v1615 = vunpack.c.l.b16 %v1190
  %v1616 = vunpack.c.l.b16 %v1202
  %v1617 = vunpack.c.l.b16 %v1214
  %v1618 = vunpack.c.l.b16 %v1226
  %v1619 = vunpack.c.l.b16 %v1238
  %v1620 = vunpack.c.l.b16 %v1250
  %v1621 = vunpack.c.l.b16 %v1262
  %v1622 = vunpack.c.l.b16 %v1274
  %v1623 = vunpack.c.l.b16 %v1286
  %v1624 = vunpack.c.l.b16 %v1298
  %v1625 = vunpack.c.l.b16 %v1310
  %v1626 = vunpack.c.l.b16 %v1322
  %v1627 = vunpack.c.l.b16 %v1334
  %v1628 = vunpack.c.l.b16 %v1346
  %v1629 = vunpack.c.l.b16 %v1358
  %v1630 = vunpack.c.l.b16 %v1370
  %v1631 = vunpack.c.l.b16 %v1382
  %v1632 = vunpack.c.l.b16 %v1394
  %v1633 = vunpack.c.l.b16 %v1406
  %v1634 = vunpack.c.l.b16 %v1418
  %v1635 = vunpack.c.l.b16 %v1430
  %v1636 = vunpack.c.l.b16 %v1442
  %v1637 = vunpack.c.l.b16 %v1454
  %v1638 = vunpack.c.l.b16 %v1466
  %v1639 = vunpack.c.l.b16 %v1478
  %v1640 = vunpack.c.l.b16 %v1490
  %v1641 = vunpack.c.l.b16 %v1502
  %v1642 = vunpack.c.l.b16 %v1514
  %v1643 = vpack.c.b16 %v1580, %v1579
  %v1644 = vpack.c.b16 %v1582, %v1581
  %v1645 = vpack.c.b16 %v1584, %v1583
  %v1646 = vpack.c.b16 %v1586, %v1585
  %v1647 = vpack.c.b16 %v1588, %v1587
  %v1648 = vpack.c.b16 %v1590, %v1589
  %v1649 = vpack.c.b16 %v1592, %v1591
  %v1650 = vpack.c.b16 %v1594, %v1593
  %v1651 = vpack.c.b16 %v1596, %v1595
  %v1652 = vpack.c.b16 %v1598, %v1597
  %v1653 = vpack.c.b16 %v1600, %v1599
  %v1654 = vpack.c.b16 %v1602, %v1601
  %v1655 = vpack.c.b16 %v1604, %v1603
  %v1656 = vpack.c.b16 %v1606, %v1605
  %v1657 = vpack.c.b16 %v1608, %v1607
  %v1658 = vpack.c.b16 %v1610, %v1609
  %v1659 = vpack.c.b16 %v1612, %v1611
  %v1660 = vpack.c.b16 %v1614, %v1613
  %v1661 = vpack.c.b16 %v1616, %v1615
  %v1662 = vpack.c.b16 %v1618, %v1617
  %v1663 = vpack.c.b16 %v1620, %v1619
  %v1664 = vpack.c.b16 %v1622, %v1621
  %v1665 = vpack.c.b16 %v1624, %v1623
  %v1666 = vpack.c.b16 %v1626, %v1625
  %v1667 = vpack.c.b16 %v1628, %v1627
  %v1668 = vpack.c.b16 %v1630, %v1629
  %v1669 = vpack.c.b16 %v1632, %v1631
  %v1670 = vpack.c.b16 %v1634, %v1633
  %v1671 = vpack.c.b16 %v1636, %v1635
  %v1672 = vpack.c.b16 %v1638, %v1637
  %v1673 = vpack.c.b16 %v1640, %v1639
  %v1674 = vpack.c.b16 %v1642, %v1641
  %v1707 = vadd.bf16 %v651, %v1643
  %v1708 = vadd.bf16 %v652, %v1644
  %v1709 = vadd.bf16 %v653, %v1645
  %v1710 = vadd.bf16 %v654, %v1646
  %v1711 = vadd.bf16 %v655, %v1647
  %v1712 = vadd.bf16 %v656, %v1648
  %v1713 = vadd.bf16 %v657, %v1649
  %v1714 = vadd.bf16 %v658, %v1650
  %v1715 = vadd.bf16 %v659, %v1651
  %v1716 = vadd.bf16 %v660, %v1652
  %v1717 = vadd.bf16 %v661, %v1653
  %v1718 = vadd.bf16 %v662, %v1654
  %v1719 = vadd.bf16 %v663, %v1655
  %v1720 = vadd.bf16 %v664, %v1656
  %v1721 = vadd.bf16 %v665, %v1657
  %v1722 = vadd.bf16 %v666, %v1658
  %v1723 = vadd.bf16 %v667, %v1659
  %v1724 = vadd.bf16 %v668, %v1660
  %v1725 = vadd.bf16 %v669, %v1661
  %v1726 = vadd.bf16 %v670, %v1662
  %v1727 = vadd.bf16 %v671, %v1663
  %v1728 = vadd.bf16 %v672, %v1664
  %v1729 = vadd.bf16 %v673, %v1665
  %v1730 = vadd.bf16 %v674, %v1666
  %v1731 = vadd.bf16 %v675, %v1667
  %v1732 = vadd.bf16 %v676, %v1668
  %v1733 = vadd.bf16 %v677, %v1669
  %v1734 = vadd.bf16 %v678, %v1670
  %v1735 = vadd.bf16 %v679, %v1671
  %v1736 = vadd.bf16 %v680, %v1672
  %v1737 = vadd.bf16 %v681, %v1673
  %v1738 = vadd.bf16 %v682, %v1674
  %vm1739 = vcmp.gt.bf16.partialorder %v1707, 0
  %vm1740 = vcmp.gt.bf16.partialorder %v1708, 0
  %vm1741 = vcmp.gt.bf16.partialorder %v1709, 0
  %vm1742 = vcmp.gt.bf16.partialorder %v1710, 0
  %vm1743 = vcmp.gt.bf16.partialorder %v1711, 0
  %vm1744 = vcmp.gt.bf16.partialorder %v1712, 0
  %vm1745 = vcmp.gt.bf16.partialorder %v1713, 0
  %vm1746 = vcmp.gt.bf16.partialorder %v1714, 0
  %vm1747 = vcmp.gt.bf16.partialorder %v1715, 0
  %vm1748 = vcmp.gt.bf16.partialorder %v1716, 0
  %vm1749 = vcmp.gt.bf16.partialorder %v1717, 0
  %vm1750 = vcmp.gt.bf16.partialorder %v1718, 0
  %vm1751 = vcmp.gt.bf16.partialorder %v1719, 0
  %vm1752 = vcmp.gt.bf16.partialorder %v1720, 0
  %vm1753 = vcmp.gt.bf16.partialorder %v1721, 0
  %vm1754 = vcmp.gt.bf16.partialorder %v1722, 0
  %vm1755 = vcmp.gt.bf16.partialorder %v1723, 0
  %vm1756 = vcmp.gt.bf16.partialorder %v1724, 0
  %vm1757 = vcmp.gt.bf16.partialorder %v1725, 0
  %vm1758 = vcmp.gt.bf16.partialorder %v1726, 0
  %vm1759 = vcmp.gt.bf16.partialorder %v1727, 0
  %vm1760 = vcmp.gt.bf16.partialorder %v1728, 0
  %vm1761 = vcmp.gt.bf16.partialorder %v1729, 0
  %vm1762 = vcmp.gt.bf16.partialorder %v1730, 0
  %vm1763 = vcmp.gt.bf16.partialorder %v1731, 0
  %vm1764 = vcmp.gt.bf16.partialorder %v1732, 0
  %vm1765 = vcmp.gt.bf16.partialorder %v1733, 0
  %vm1766 = vcmp.gt.bf16.partialorder %v1734, 0
  %vm1767 = vcmp.gt.bf16.partialorder %v1735, 0
  %vm1768 = vcmp.gt.bf16.partialorder %v1736, 0
  %vm1769 = vcmp.gt.bf16.partialorder %v1737, 0
  %vm1770 = vcmp.gt.bf16.partialorder %v1738, 0
  %v1771 = vmul.bf16 %v1707, 1045249613
  %v1772 = vmul.bf16 %v1708, 1045249613
  %v1773 = vmul.bf16 %v1709, 1045249613
  %v1774 = vmul.bf16 %v1710, 1045249613
  %v1775 = vmul.bf16 %v1711, 1045249613
  %v1776 = vmul.bf16 %v1712, 1045249613
  %v1777 = vmul.bf16 %v1713, 1045249613
  %v1778 = vmul.bf16 %v1714, 1045249613
  %v1779 = vmul.bf16 %v1715, 1045249613
  %v1780 = vmul.bf16 %v1716, 1045249613
  %v1781 = vmul.bf16 %v1717, 1045249613
  %v1782 = vmul.bf16 %v1718, 1045249613
  %v1783 = vmul.bf16 %v1719, 1045249613
  %v1784 = vmul.bf16 %v1720, 1045249613
  %v1785 = vmul.bf16 %v1721, 1045249613
  %v1786 = vmul.bf16 %v1722, 1045249613
  %v1787 = vmul.bf16 %v1723, 1045249613
  %v1788 = vmul.bf16 %v1724, 1045249613
  %v1789 = vmul.bf16 %v1725, 1045249613
  %v1790 = vmul.bf16 %v1726, 1045249613
  %v1791 = vmul.bf16 %v1727, 1045249613
  %v1792 = vmul.bf16 %v1728, 1045249613
  %v1793 = vmul.bf16 %v1729, 1045249613
  %v1794 = vmul.bf16 %v1730, 1045249613
  %v1795 = vmul.bf16 %v1731, 1045249613
  %v1796 = vmul.bf16 %v1732, 1045249613
  %v1797 = vmul.bf16 %v1733, 1045249613
  %v1798 = vmul.bf16 %v1734, 1045249613
  %v1799 = vmul.bf16 %v1735, 1045249613
  %v1800 = vmul.bf16 %v1736, 1045249613
  %v1801 = vmul.bf16 %v1737, 1045249613
  %v1802 = vmul.bf16 %v1738, 1045249613
  %v1803 = vsel %vm1739, %v1707, %v1771
  %v1804 = vsel %vm1740, %v1708, %v1772
  %v1805 = vsel %vm1741, %v1709, %v1773
  %v1806 = vsel %vm1742, %v1710, %v1774
  %v1807 = vsel %vm1743, %v1711, %v1775
  %v1808 = vsel %vm1744, %v1712, %v1776
  %v1809 = vsel %vm1745, %v1713, %v1777
  %v1810 = vsel %vm1746, %v1714, %v1778
  %v1811 = vsel %vm1747, %v1715, %v1779
  %v1812 = vsel %vm1748, %v1716, %v1780
  %v1813 = vsel %vm1749, %v1717, %v1781
  %v1814 = vsel %vm1750, %v1718, %v1782
  %v1815 = vsel %vm1751, %v1719, %v1783
  %v1816 = vsel %vm1752, %v1720, %v1784
  %v1817 = vsel %vm1753, %v1721, %v1785
  %v1818 = vsel %vm1754, %v1722, %v1786
  %v1819 = vsel %vm1755, %v1723, %v1787
  %v1820 = vsel %vm1756, %v1724, %v1788
  %v1821 = vsel %vm1757, %v1725, %v1789
  %v1822 = vsel %vm1758, %v1726, %v1790
  %v1823 = vsel %vm1759, %v1727, %v1791
  %v1824 = vsel %vm1760, %v1728, %v1792
  %v1825 = vsel %vm1761, %v1729, %v1793
  %v1826 = vsel %vm1762, %v1730, %v1794
  %v1827 = vsel %vm1763, %v1731, %v1795
  %v1828 = vsel %vm1764, %v1732, %v1796
  %v1829 = vsel %vm1765, %v1733, %v1797
  %v1830 = vsel %vm1766, %v1734, %v1798
  %v1831 = vsel %vm1767, %v1735, %v1799
  %v1832 = vsel %vm1768, %v1736, %v1800
  %v1833 = vsel %vm1769, %v1737, %v1801
  %v1834 = vsel %vm1770, %v1738, %v1802
  %v1835 = vld [vmem:[%s3] sm:$0xff]
  %v1836 = vld [vmem:[%s3 + $0x8] sm:$0xff]
  %v1837 = vld [vmem:[%s3 + $0x10] sm:$0xff]
  %v1838 = vld [vmem:[%s3 + $0x18] sm:$0xff]
  %v1839 = vld [vmem:[%s3 + $0x20] sm:$0xff]
  %v1840 = vld [vmem:[%s3 + $0x28] sm:$0xff]
  %v1841 = vld [vmem:[%s3 + $0x30] sm:$0xff]
  %v1842 = vld [vmem:[%s3 + $0x38] sm:$0xff]
  %v1843 = vld [vmem:[%s3 + $0x40] sm:$0xff]
  %v1844 = vld [vmem:[%s3 + $0x48] sm:$0xff]
  %v1845 = vld [vmem:[%s3 + $0x50] sm:$0xff]
  %v1846 = vld [vmem:[%s3 + $0x58] sm:$0xff]
  %v1847 = vld [vmem:[%s3 + $0x60] sm:$0xff]
  %v1848 = vld [vmem:[%s3 + $0x68] sm:$0xff]
  %v1849 = vld [vmem:[%s3 + $0x70] sm:$0xff]
  %v1850 = vld [vmem:[%s3 + $0x78] sm:$0xff]
  %v1851 = vld [vmem:[%s3 + $0x80] sm:$0xff]
  %v1852 = vld [vmem:[%s3 + $0x88] sm:$0xff]
  %v1853 = vld [vmem:[%s3 + $0x90] sm:$0xff]
  %v1854 = vld [vmem:[%s3 + $0x98] sm:$0xff]
  %v1855 = vld [vmem:[%s3 + $0xa0] sm:$0xff]
  %v1856 = vld [vmem:[%s3 + $0xa8] sm:$0xff]
  %v1857 = vld [vmem:[%s3 + $0xb0] sm:$0xff]
  %v1858 = vld [vmem:[%s3 + $0xb8] sm:$0xff]
  %v1859 = vld [vmem:[%s3 + $0xc0] sm:$0xff]
  %v1860 = vld [vmem:[%s3 + $0xc8] sm:$0xff]
  %v1861 = vld [vmem:[%s3 + $0xd0] sm:$0xff]
  %v1862 = vld [vmem:[%s3 + $0xd8] sm:$0xff]
  %v1863 = vld [vmem:[%s3 + $0xe0] sm:$0xff]
  %v1864 = vld [vmem:[%s3 + $0xe8] sm:$0xff]
  %v1865 = vld [vmem:[%s3 + $0xf0] sm:$0xff]
  %v1866 = vld [vmem:[%s3 + $0xf8] sm:$0xff]
  %v1867 = vld [vmem:[%s3 + $0x100] sm:$0xff]
  %v1868 = vld [vmem:[%s3 + $0x108] sm:$0xff]
  %v1869 = vld [vmem:[%s3 + $0x110] sm:$0xff]
  %v1870 = vld [vmem:[%s3 + $0x118] sm:$0xff]
  %v1871 = vld [vmem:[%s3 + $0x120] sm:$0xff]
  %v1872 = vld [vmem:[%s3 + $0x128] sm:$0xff]
  %v1873 = vld [vmem:[%s3 + $0x130] sm:$0xff]
  %v1874 = vld [vmem:[%s3 + $0x138] sm:$0xff]
  %v1875 = vld [vmem:[%s3 + $0x140] sm:$0xff]
  %v1876 = vld [vmem:[%s3 + $0x148] sm:$0xff]
  %v1877 = vld [vmem:[%s3 + $0x150] sm:$0xff]
  %v1878 = vld [vmem:[%s3 + $0x158] sm:$0xff]
  %v1879 = vld [vmem:[%s3 + $0x160] sm:$0xff]
  %v1880 = vld [vmem:[%s3 + $0x168] sm:$0xff]
  %v1881 = vld [vmem:[%s3 + $0x170] sm:$0xff]
  %v1882 = vld [vmem:[%s3 + $0x178] sm:$0xff]
  %v1883 = vld [vmem:[%s3 + $0x180] sm:$0xff]
  %v1884 = vld [vmem:[%s3 + $0x188] sm:$0xff]
  %v1885 = vld [vmem:[%s3 + $0x190] sm:$0xff]
  %v1886 = vld [vmem:[%s3 + $0x198] sm:$0xff]
  %v1887 = vld [vmem:[%s3 + $0x1a0] sm:$0xff]
  %v1888 = vld [vmem:[%s3 + $0x1a8] sm:$0xff]
  %v1889 = vld [vmem:[%s3 + $0x1b0] sm:$0xff]
  %v1890 = vld [vmem:[%s3 + $0x1b8] sm:$0xff]
  %v1891 = vld [vmem:[%s3 + $0x1c0] sm:$0xff]
  %v1892 = vld [vmem:[%s3 + $0x1c8] sm:$0xff]
  %v1893 = vld [vmem:[%s3 + $0x1d0] sm:$0xff]
  %v1894 = vld [vmem:[%s3 + $0x1d8] sm:$0xff]
  %v1895 = vld [vmem:[%s3 + $0x1e0] sm:$0xff]
  %v1896 = vld [vmem:[%s3 + $0x1e8] sm:$0xff]
  %v1897 = vld [vmem:[%s3 + $0x1f0] sm:$0xff]
  %v1898 = vld [vmem:[%s3 + $0x1f8] sm:$0xff]
  %v1963 = vunpack.c.l.b16 %v1835
  %v1964 = vunpack.c.h.b16 %v1835
  %v1965 = vunpack.c.l.b16 %v1836
  %v1966 = vunpack.c.h.b16 %v1836
  %v1967 = vunpack.c.l.b16 %v1837
  %v1968 = vunpack.c.h.b16 %v1837
  %v1969 = vunpack.c.l.b16 %v1838
  %v1970 = vunpack.c.h.b16 %v1838
  %v1971 = vunpack.c.l.b16 %v1839
  %v1972 = vunpack.c.h.b16 %v1839
  %v1973 = vunpack.c.l.b16 %v1840
  %v1974 = vunpack.c.h.b16 %v1840
  %v1975 = vunpack.c.l.b16 %v1841
  %v1976 = vunpack.c.h.b16 %v1841
  %v1977 = vunpack.c.l.b16 %v1842
  %v1978 = vunpack.c.h.b16 %v1842
  %v1979 = vunpack.c.l.b16 %v1843
  %v1980 = vunpack.c.h.b16 %v1843
  %v1981 = vunpack.c.l.b16 %v1844
  %v1982 = vunpack.c.h.b16 %v1844
  %v1983 = vunpack.c.l.b16 %v1845
  %v1984 = vunpack.c.h.b16 %v1845
  %v1985 = vunpack.c.l.b16 %v1846
  %v1986 = vunpack.c.h.b16 %v1846
  %v1987 = vunpack.c.l.b16 %v1847
  %v1988 = vunpack.c.h.b16 %v1847
  %v1989 = vunpack.c.l.b16 %v1848
  %v1990 = vunpack.c.h.b16 %v1848
  %v1991 = vunpack.c.l.b16 %v1849
  %v1992 = vunpack.c.h.b16 %v1849
  %v1993 = vunpack.c.l.b16 %v1850
  %v1994 = vunpack.c.h.b16 %v1850
  %v1995 = vunpack.c.l.b16 %v1851
  %v1996 = vunpack.c.h.b16 %v1851
  %v1997 = vunpack.c.l.b16 %v1852
  %v1998 = vunpack.c.h.b16 %v1852
  %v1999 = vunpack.c.l.b16 %v1853
  %v2000 = vunpack.c.h.b16 %v1853
  %v2001 = vunpack.c.l.b16 %v1854
  %v2002 = vunpack.c.h.b16 %v1854
  %v2003 = vunpack.c.l.b16 %v1855
  %v2004 = vunpack.c.h.b16 %v1855
  %v2005 = vunpack.c.l.b16 %v1856
  %v2006 = vunpack.c.h.b16 %v1856
  %v2007 = vunpack.c.l.b16 %v1857
  %v2008 = vunpack.c.h.b16 %v1857
  %v2009 = vunpack.c.l.b16 %v1858
  %v2010 = vunpack.c.h.b16 %v1858
  %v2011 = vunpack.c.l.b16 %v1859
  %v2012 = vunpack.c.h.b16 %v1859
  %v2013 = vunpack.c.l.b16 %v1860
  %v2014 = vunpack.c.h.b16 %v1860
  %v2015 = vunpack.c.l.b16 %v1861
  %v2016 = vunpack.c.h.b16 %v1861
  %v2017 = vunpack.c.l.b16 %v1862
  %v2018 = vunpack.c.h.b16 %v1862
  %v2019 = vunpack.c.l.b16 %v1863
  %v2020 = vunpack.c.h.b16 %v1863
  %v2021 = vunpack.c.l.b16 %v1864
  %v2022 = vunpack.c.h.b16 %v1864
  %v2023 = vunpack.c.l.b16 %v1865
  %v2024 = vunpack.c.h.b16 %v1865
  %v2025 = vunpack.c.l.b16 %v1866
  %v2026 = vunpack.c.h.b16 %v1866
  %v2027 = vunpack.c.l.b16 %v1867
  %v2028 = vunpack.c.h.b16 %v1867
  %v2029 = vunpack.c.l.b16 %v1868
  %v2030 = vunpack.c.h.b16 %v1868
  %v2031 = vunpack.c.l.b16 %v1869
  %v2032 = vunpack.c.h.b16 %v1869
  %v2033 = vunpack.c.l.b16 %v1870
  %v2034 = vunpack.c.h.b16 %v1870
  %v2035 = vunpack.c.l.b16 %v1871
  %v2036 = vunpack.c.h.b16 %v1871
  %v2037 = vunpack.c.l.b16 %v1872
  %v2038 = vunpack.c.h.b16 %v1872
  %v2039 = vunpack.c.l.b16 %v1873
  %v2040 = vunpack.c.h.b16 %v1873
  %v2041 = vunpack.c.l.b16 %v1874
  %v2042 = vunpack.c.h.b16 %v1874
  %v2043 = vunpack.c.l.b16 %v1875
  %v2044 = vunpack.c.h.b16 %v1875
  %v2045 = vunpack.c.l.b16 %v1876
  %v2046 = vunpack.c.h.b16 %v1876
  %v2047 = vunpack.c.l.b16 %v1877
  %v2048 = vunpack.c.h.b16 %v1877
  %v2049 = vunpack.c.l.b16 %v1878
  %v2050 = vunpack.c.h.b16 %v1878
  %v2051 = vunpack.c.l.b16 %v1879
  %v2052 = vunpack.c.h.b16 %v1879
  %v2053 = vunpack.c.l.b16 %v1880
  %v2054 = vunpack.c.h.b16 %v1880
  %v2055 = vunpack.c.l.b16 %v1881
  %v2056 = vunpack.c.h.b16 %v1881
  %v2057 = vunpack.c.l.b16 %v1882
  %v2058 = vunpack.c.h.b16 %v1882
  %v2059 = vunpack.c.l.b16 %v1883
  %v2060 = vunpack.c.h.b16 %v1883
  %v2061 = vunpack.c.l.b16 %v1884
  %v2062 = vunpack.c.h.b16 %v1884
  %v2063 = vunpack.c.l.b16 %v1885
  %v2064 = vunpack.c.h.b16 %v1885
  %v2065 = vunpack.c.l.b16 %v1886
  %v2066 = vunpack.c.h.b16 %v1886
  %v2067 = vunpack.c.l.b16 %v1887
  %v2068 = vunpack.c.h.b16 %v1887
  %v2069 = vunpack.c.l.b16 %v1888
  %v2070 = vunpack.c.h.b16 %v1888
  %v2071 = vunpack.c.l.b16 %v1889
  %v2072 = vunpack.c.h.b16 %v1889
  %v2073 = vunpack.c.l.b16 %v1890
  %v2074 = vunpack.c.h.b16 %v1890
  %v2075 = vunpack.c.l.b16 %v1891
  %v2076 = vunpack.c.h.b16 %v1891
  %v2077 = vunpack.c.l.b16 %v1892
  %v2078 = vunpack.c.h.b16 %v1892
  %v2079 = vunpack.c.l.b16 %v1893
  %v2080 = vunpack.c.h.b16 %v1893
  %v2081 = vunpack.c.l.b16 %v1894
  %v2082 = vunpack.c.h.b16 %v1894
  %v2083 = vunpack.c.l.b16 %v1895
  %v2084 = vunpack.c.h.b16 %v1895
  %v2085 = vunpack.c.l.b16 %v1896
  %v2086 = vunpack.c.h.b16 %v1896
  %v2087 = vunpack.c.l.b16 %v1897
  %v2088 = vunpack.c.h.b16 %v1897
  %v2089 = vunpack.c.l.b16 %v1898
  %v2090 = vunpack.c.h.b16 %v1898
  %v2091 = vpack.c.b16 %v1967, %v1963
  %v2092 = vpack.c.b16 %v1968, %v1964
  %v2093 = vpack.c.b16 %v1969, %v1965
  %v2094 = vpack.c.b16 %v1970, %v1966
  %v2095 = vpack.c.b16 %v1975, %v1971
  %v2096 = vpack.c.b16 %v1976, %v1972
  %v2097 = vpack.c.b16 %v1977, %v1973
  %v2098 = vpack.c.b16 %v1978, %v1974
  %v2099 = vpack.c.b16 %v1983, %v1979
  %v2100 = vpack.c.b16 %v1984, %v1980
  %v2101 = vpack.c.b16 %v1985, %v1981
  %v2102 = vpack.c.b16 %v1986, %v1982
  %v2103 = vpack.c.b16 %v1991, %v1987
  %v2104 = vpack.c.b16 %v1992, %v1988
  %v2105 = vpack.c.b16 %v1993, %v1989
  %v2106 = vpack.c.b16 %v1994, %v1990
  %v2107 = vpack.c.b16 %v1999, %v1995
  %v2108 = vpack.c.b16 %v2000, %v1996
  %v2109 = vpack.c.b16 %v2001, %v1997
  %v2110 = vpack.c.b16 %v2002, %v1998
  %v2111 = vpack.c.b16 %v2007, %v2003
  %v2112 = vpack.c.b16 %v2008, %v2004
  %v2113 = vpack.c.b16 %v2009, %v2005
  %v2114 = vpack.c.b16 %v2010, %v2006
  %v2115 = vpack.c.b16 %v2015, %v2011
  %v2116 = vpack.c.b16 %v2016, %v2012
  %v2117 = vpack.c.b16 %v2017, %v2013
  %v2118 = vpack.c.b16 %v2018, %v2014
  %v2119 = vpack.c.b16 %v2023, %v2019
  %v2120 = vpack.c.b16 %v2024, %v2020
  %v2121 = vpack.c.b16 %v2025, %v2021
  %v2122 = vpack.c.b16 %v2026, %v2022
  %v2123 = vpack.c.b16 %v2031, %v2027
  %v2124 = vpack.c.b16 %v2032, %v2028
  %v2125 = vpack.c.b16 %v2033, %v2029
  %v2126 = vpack.c.b16 %v2034, %v2030
  %v2127 = vpack.c.b16 %v2039, %v2035
  %v2128 = vpack.c.b16 %v2040, %v2036
  %v2129 = vpack.c.b16 %v2041, %v2037
  %v2130 = vpack.c.b16 %v2042, %v2038
  %v2131 = vpack.c.b16 %v2047, %v2043
  %v2132 = vpack.c.b16 %v2048, %v2044
  %v2133 = vpack.c.b16 %v2049, %v2045
  %v2134 = vpack.c.b16 %v2050, %v2046
  %v2135 = vpack.c.b16 %v2055, %v2051
  %v2136 = vpack.c.b16 %v2056, %v2052
  %v2137 = vpack.c.b16 %v2057, %v2053
  %v2138 = vpack.c.b16 %v2058, %v2054
  %v2139 = vpack.c.b16 %v2063, %v2059
  %v2140 = vpack.c.b16 %v2064, %v2060
  %v2141 = vpack.c.b16 %v2065, %v2061
  %v2142 = vpack.c.b16 %v2066, %v2062
  %v2143 = vpack.c.b16 %v2071, %v2067
  %v2144 = vpack.c.b16 %v2072, %v2068
  %v2145 = vpack.c.b16 %v2073, %v2069
  %v2146 = vpack.c.b16 %v2074, %v2070
  %v2147 = vpack.c.b16 %v2079, %v2075
  %v2148 = vpack.c.b16 %v2080, %v2076
  %v2149 = vpack.c.b16 %v2081, %v2077
  %v2150 = vpack.c.b16 %v2082, %v2078
  %v2151 = vpack.c.b16 %v2087, %v2083
  %v2152 = vpack.c.b16 %v2088, %v2084
  %v2153 = vpack.c.b16 %v2089, %v2085
  %v2154 = vpack.c.b16 %v2090, %v2086
  %2219 = vmatprep.subr.bf16.mxu0 0
  %2220 = vmatpush1.bf16.msra.mxu0 %v1803
  %2221 = vmatprep.subr.bf16.mxu0 0
  %2222 = vmatpush1.bf16.msra.mxu0 %v1804
  %2223 = vmatprep.subr.bf16.mxu0 0
  %2224 = vmatpush1.bf16.msra.mxu0 %v1805
  %2225 = vmatprep.subr.bf16.mxu0 0
  %2226 = vmatpush1.bf16.msra.mxu0 %v1806
  %2227 = vmatprep.subr.bf16.mxu0 0
  %2228 = vmatpush1.bf16.msra.mxu0 %v1807
  %2229 = vmatprep.subr.bf16.mxu0 0
  %2230 = vmatpush1.bf16.msra.mxu0 %v1808
  %2231 = vmatprep.subr.bf16.mxu0 0
  %2232 = vmatpush1.bf16.msra.mxu0 %v1809
  %2233 = vmatprep.subr.bf16.mxu0 0
  %2234 = vmatpush1.bf16.msra.mxu0 %v1810
  %2235 = vmatprep.subr.bf16.mxu0 0
  %2236 = vmatpush1.bf16.msra.mxu0 %v1811
  %2237 = vmatprep.subr.bf16.mxu0 0
  %2238 = vmatpush1.bf16.msra.mxu0 %v1812
  %2239 = vmatprep.subr.bf16.mxu0 0
  %2240 = vmatpush1.bf16.msra.mxu0 %v1813
  %2241 = vmatprep.subr.bf16.mxu0 0
  %2242 = vmatpush1.bf16.msra.mxu0 %v1814
  %2243 = vmatprep.subr.bf16.mxu0 0
  %2244 = vmatpush1.bf16.msra.mxu0 %v1815
  %2245 = vmatprep.subr.bf16.mxu0 0
  %2246 = vmatpush1.bf16.msra.mxu0 %v1816
  %2247 = vmatprep.subr.bf16.mxu0 0
  %2248 = vmatpush1.bf16.msra.mxu0 %v1817
  %2249 = vmatprep.subr.bf16.mxu0 0
  %2250 = vmatpush1.bf16.msra.mxu0 %v1818
  %2251 = vmatprep.mubr.bf16.mxu0 %v2092
  %2252 = vmatmul.mubr.bf16.gmra.mrb[0].mxu0 %v2091
  %v2253 = vpop.f32.mrb[0].mxu0
  %v2254 = vadd.f32 0.0, %v2253
  %v2255 = vpop.f32.mrb[0].mxu0
  %v2256 = vpop.f32.mrb[0].mxu0
  %v2257 = vadd.f32 0.0, %v2256
  %v2258 = vpop.f32.mrb[0].mxu0
  %2259 = vmatprep.mubr.bf16.mxu0 %v2096
  %2260 = vmatmul.mubr.bf16.gmra.mrb[0].mxu0 %v2095
  %v2261 = vpop.f32.mrb[0].mxu0
  %v2262 = vadd.f32 0.0, %v2261
  %v2263 = vpop.f32.mrb[0].mxu0
  %v2264 = vpop.f32.mrb[0].mxu0
  %v2265 = vadd.f32 0.0, %v2264
  %v2266 = vpop.f32.mrb[0].mxu0
  %2267 = vmatprep.mubr.bf16.mxu0 %v2100
  %2268 = vmatmul.mubr.bf16.gmra.mrb[0].mxu0 %v2099
  %v2269 = vpop.f32.mrb[0].mxu0
  %v2270 = vadd.f32 0.0, %v2269
  %v2271 = vpop.f32.mrb[0].mxu0
  %v2272 = vpop.f32.mrb[0].mxu0
  %v2273 = vadd.f32 0.0, %v2272
  %v2274 = vpop.f32.mrb[0].mxu0
  %2275 = vmatprep.mubr.bf16.mxu0 %v2104
  %2276 = vmatmul.mubr.bf16.gmra.mrb[0].mxu0 %v2103
  %v2277 = vpop.f32.mrb[0].mxu0
  %v2278 = vadd.f32 0.0, %v2277
  %v2279 = vpop.f32.mrb[0].mxu0
  %v2280 = vpop.f32.mrb[0].mxu0
  %v2281 = vadd.f32 0.0, %v2280
  %v2282 = vpop.f32.mrb[0].mxu0
  %2283 = vmatprep.mubr.bf16.mxu0 %v2108
  %2284 = vmatmul.mubr.bf16.gmra.mrb[0].mxu0 %v2107
  %v2285 = vpop.f32.mrb[0].mxu0
  %v2286 = vadd.f32 0.0, %v2285
  %v2287 = vpop.f32.mrb[0].mxu0
  %v2288 = vpop.f32.mrb[0].mxu0
  %v2289 = vadd.f32 0.0, %v2288
  %v2290 = vpop.f32.mrb[0].mxu0
  %2291 = vmatprep.mubr.bf16.mxu0 %v2112
  %2292 = vmatmul.mubr.bf16.gmra.mrb[0].mxu0 %v2111
  %v2293 = vpop.f32.mrb[0].mxu0
  %v2294 = vadd.f32 0.0, %v2293
  %v2295 = vpop.f32.mrb[0].mxu0
  %v2296 = vpop.f32.mrb[0].mxu0
  %v2297 = vadd.f32 0.0, %v2296
  %v2298 = vpop.f32.mrb[0].mxu0
  %2299 = vmatprep.mubr.bf16.mxu0 %v2116
  %2300 = vmatmul.mubr.bf16.gmra.mrb[0].mxu0 %v2115
  %v2301 = vpop.f32.mrb[0].mxu0
  %v2302 = vadd.f32 0.0, %v2301
  %v2303 = vpop.f32.mrb[0].mxu0
  %v2304 = vpop.f32.mrb[0].mxu0
  %v2305 = vadd.f32 0.0, %v2304
  %v2306 = vpop.f32.mrb[0].mxu0
  %2307 = vmatprep.mubr.bf16.mxu0 %v2120
  %2308 = vmatmul.mubr.bf16.gmra.mrb[0].mxu0 %v2119
  %v2309 = vpop.f32.mrb[0].mxu0
  %v2310 = vadd.f32 0.0, %v2309
  %v2311 = vpop.f32.mrb[0].mxu0
  %v2312 = vpop.f32.mrb[0].mxu0
  %v2313 = vadd.f32 0.0, %v2312
  %v2314 = vpop.f32.mrb[0].mxu0
  %2315 = vmatprep.mubr.bf16.mxu0 %v2124
  %2316 = vmatmul.mubr.bf16.gmra.mrb[0].mxu0 %v2123
  %v2317 = vpop.f32.mrb[0].mxu0
  %v2318 = vadd.f32 0.0, %v2317
  %v2319 = vpop.f32.mrb[0].mxu0
  %v2320 = vpop.f32.mrb[0].mxu0
  %v2321 = vadd.f32 0.0, %v2320
  %v2322 = vpop.f32.mrb[0].mxu0
  %2323 = vmatprep.mubr.bf16.mxu0 %v2128
  %2324 = vmatmul.mubr.bf16.gmra.mrb[0].mxu0 %v2127
  %v2325 = vpop.f32.mrb[0].mxu0
  %v2326 = vadd.f32 0.0, %v2325
  %v2327 = vpop.f32.mrb[0].mxu0
  %v2328 = vpop.f32.mrb[0].mxu0
  %v2329 = vadd.f32 0.0, %v2328
  %v2330 = vpop.f32.mrb[0].mxu0
  %2331 = vmatprep.mubr.bf16.mxu0 %v2132
  %2332 = vmatmul.mubr.bf16.gmra.mrb[0].mxu0 %v2131
  %v2333 = vpop.f32.mrb[0].mxu0
  %v2334 = vadd.f32 0.0, %v2333
  %v2335 = vpop.f32.mrb[0].mxu0
  %v2336 = vpop.f32.mrb[0].mxu0
  %v2337 = vadd.f32 0.0, %v2336
  %v2338 = vpop.f32.mrb[0].mxu0
  %2339 = vmatprep.mubr.bf16.mxu0 %v2136
  %2340 = vmatmul.mubr.bf16.gmra.mrb[0].mxu0 %v2135
  %v2341 = vpop.f32.mrb[0].mxu0
  %v2342 = vadd.f32 0.0, %v2341
  %v2343 = vpop.f32.mrb[0].mxu0
  %v2344 = vpop.f32.mrb[0].mxu0
  %v2345 = vadd.f32 0.0, %v2344
  %v2346 = vpop.f32.mrb[0].mxu0
  %2347 = vmatprep.mubr.bf16.mxu0 %v2140
  %2348 = vmatmul.mubr.bf16.gmra.mrb[0].mxu0 %v2139
  %v2349 = vpop.f32.mrb[0].mxu0
  %v2350 = vadd.f32 0.0, %v2349
  %v2351 = vpop.f32.mrb[0].mxu0
  %v2352 = vpop.f32.mrb[0].mxu0
  %v2353 = vadd.f32 0.0, %v2352
  %v2354 = vpop.f32.mrb[0].mxu0
  %2355 = vmatprep.mubr.bf16.mxu0 %v2144
  %2356 = vmatmul.mubr.bf16.gmra.mrb[0].mxu0 %v2143
  %v2357 = vpop.f32.mrb[0].mxu0
  %v2358 = vadd.f32 0.0, %v2357
  %v2359 = vpop.f32.mrb[0].mxu0
  %v2360 = vpop.f32.mrb[0].mxu0
  %v2361 = vadd.f32 0.0, %v2360
  %v2362 = vpop.f32.mrb[0].mxu0
  %2363 = vmatprep.mubr.bf16.mxu0 %v2148
  %2364 = vmatmul.mubr.bf16.gmra.mrb[0].mxu0 %v2147
  %v2365 = vpop.f32.mrb[0].mxu0
  %v2366 = vadd.f32 0.0, %v2365
  %v2367 = vpop.f32.mrb[0].mxu0
  %v2368 = vpop.f32.mrb[0].mxu0
  %v2369 = vadd.f32 0.0, %v2368
  %v2370 = vpop.f32.mrb[0].mxu0
  %2371 = vmatprep.mubr.bf16.mxu0 %v2152
  %2372 = vmatmul.mubr.bf16.gmra.mrb[0].mxu0 %v2151
  %v2373 = vpop.f32.mrb[0].mxu0
  %v2374 = vadd.f32 0.0, %v2373
  %v2375 = vpop.f32.mrb[0].mxu0
  %v2376 = vpop.f32.mrb[0].mxu0
  %v2377 = vadd.f32 0.0, %v2376
  %v2378 = vpop.f32.mrb[0].mxu0
  %2379 = vdwg.mxu0
  %2380 = vmatprep.subr.bf16.mxu0 0
  %2381 = vmatpush1.bf16.msra.mxu0 %v1819
  %2382 = vmatprep.subr.bf16.mxu0 0
  %2383 = vmatpush1.bf16.msra.mxu0 %v1820
  %2384 = vmatprep.subr.bf16.mxu0 0
  %2385 = vmatpush1.bf16.msra.mxu0 %v1821
  %2386 = vmatprep.subr.bf16.mxu0 0
  %2387 = vmatpush1.bf16.msra.mxu0 %v1822
  %2388 = vmatprep.subr.bf16.mxu0 0
  %2389 = vmatpush1.bf16.msra.mxu0 %v1823
  %2390 = vmatprep.subr.bf16.mxu0 0
  %2391 = vmatpush1.bf16.msra.mxu0 %v1824
  %2392 = vmatprep.subr.bf16.mxu0 0
  %2393 = vmatpush1.bf16.msra.mxu0 %v1825
  %2394 = vmatprep.subr.bf16.mxu0 0
  %2395 = vmatpush1.bf16.msra.mxu0 %v1826
  %2396 = vmatprep.subr.bf16.mxu0 0
  %2397 = vmatpush1.bf16.msra.mxu0 %v1827
  %2398 = vmatprep.subr.bf16.mxu0 0
  %2399 = vmatpush1.bf16.msra.mxu0 %v1828
  %2400 = vmatprep.subr.bf16.mxu0 0
  %2401 = vmatpush1.bf16.msra.mxu0 %v1829
  %2402 = vmatprep.subr.bf16.mxu0 0
  %2403 = vmatpush1.bf16.msra.mxu0 %v1830
  %2404 = vmatprep.subr.bf16.mxu0 0
  %2405 = vmatpush1.bf16.msra.mxu0 %v1831
  %2406 = vmatprep.subr.bf16.mxu0 0
  %2407 = vmatpush1.bf16.msra.mxu0 %v1832
  %2408 = vmatprep.subr.bf16.mxu0 0
  %2409 = vmatpush1.bf16.msra.mxu0 %v1833
  %2410 = vmatprep.subr.bf16.mxu0 0
  %2411 = vmatpush1.bf16.msra.mxu0 %v1834
  %2412 = vmatprep.mubr.bf16.mxu0 %v2094
  %2413 = vmatmul.mubr.bf16.gmra.mrb[0].mxu0 %v2093
  %v2414 = vpop.f32.mrb[0].mxu0
  %v2415 = vadd.f32 %v2254, %v2414
  %v2416 = vpop.f32.mrb[0].mxu0
  %v2417 = vpop.f32.mrb[0].mxu0
  %v2418 = vadd.f32 %v2257, %v2417
  %v2419 = vpop.f32.mrb[0].mxu0
  %2420 = vmatprep.mubr.bf16.mxu0 %v2098
  %2421 = vmatmul.mubr.bf16.gmra.mrb[0].mxu0 %v2097
  %v2422 = vpop.f32.mrb[0].mxu0
  %v2423 = vadd.f32 %v2262, %v2422
  %v2424 = vpop.f32.mrb[0].mxu0
  %v2425 = vpop.f32.mrb[0].mxu0
  %v2426 = vadd.f32 %v2265, %v2425
  %v2427 = vpop.f32.mrb[0].mxu0
  %2428 = vmatprep.mubr.bf16.mxu0 %v2102
  %2429 = vmatmul.mubr.bf16.gmra.mrb[0].mxu0 %v2101
  %v2430 = vpop.f32.mrb[0].mxu0
  %v2431 = vadd.f32 %v2270, %v2430
  %v2432 = vpop.f32.mrb[0].mxu0
  %v2433 = vpop.f32.mrb[0].mxu0
  %v2434 = vadd.f32 %v2273, %v2433
  %v2435 = vpop.f32.mrb[0].mxu0
  %2436 = vmatprep.mubr.bf16.mxu0 %v2106
  %2437 = vmatmul.mubr.bf16.gmra.mrb[0].mxu0 %v2105
  %v2438 = vpop.f32.mrb[0].mxu0
  %v2439 = vadd.f32 %v2278, %v2438
  %v2440 = vpop.f32.mrb[0].mxu0
  %v2441 = vpop.f32.mrb[0].mxu0
  %v2442 = vadd.f32 %v2281, %v2441
  %v2443 = vpop.f32.mrb[0].mxu0
  %2444 = vmatprep.mubr.bf16.mxu0 %v2110
  %2445 = vmatmul.mubr.bf16.gmra.mrb[0].mxu0 %v2109
  %v2446 = vpop.f32.mrb[0].mxu0
  %v2447 = vadd.f32 %v2286, %v2446
  %v2448 = vpop.f32.mrb[0].mxu0
  %v2449 = vpop.f32.mrb[0].mxu0
  %v2450 = vadd.f32 %v2289, %v2449
  %v2451 = vpop.f32.mrb[0].mxu0
  %2452 = vmatprep.mubr.bf16.mxu0 %v2114
  %2453 = vmatmul.mubr.bf16.gmra.mrb[0].mxu0 %v2113
  %v2454 = vpop.f32.mrb[0].mxu0
  %v2455 = vadd.f32 %v2294, %v2454
  %v2456 = vpop.f32.mrb[0].mxu0
  %v2457 = vpop.f32.mrb[0].mxu0
  %v2458 = vadd.f32 %v2297, %v2457
  %v2459 = vpop.f32.mrb[0].mxu0
  %2460 = vmatprep.mubr.bf16.mxu0 %v2118
  %2461 = vmatmul.mubr.bf16.gmra.mrb[0].mxu0 %v2117
  %v2462 = vpop.f32.mrb[0].mxu0
  %v2463 = vadd.f32 %v2302, %v2462
  %v2464 = vpop.f32.mrb[0].mxu0
  %v2465 = vpop.f32.mrb[0].mxu0
  %v2466 = vadd.f32 %v2305, %v2465
  %v2467 = vpop.f32.mrb[0].mxu0
  %2468 = vmatprep.mubr.bf16.mxu0 %v2122
  %2469 = vmatmul.mubr.bf16.gmra.mrb[0].mxu0 %v2121
  %v2470 = vpop.f32.mrb[0].mxu0
  %v2471 = vadd.f32 %v2310, %v2470
  %v2472 = vpop.f32.mrb[0].mxu0
  %v2473 = vpop.f32.mrb[0].mxu0
  %v2474 = vadd.f32 %v2313, %v2473
  %v2475 = vpop.f32.mrb[0].mxu0
  %2476 = vmatprep.mubr.bf16.mxu0 %v2126
  %2477 = vmatmul.mubr.bf16.gmra.mrb[0].mxu0 %v2125
  %v2478 = vpop.f32.mrb[0].mxu0
  %v2479 = vadd.f32 %v2318, %v2478
  %v2480 = vpop.f32.mrb[0].mxu0
  %v2481 = vpop.f32.mrb[0].mxu0
  %v2482 = vadd.f32 %v2321, %v2481
  %v2483 = vpop.f32.mrb[0].mxu0
  %2484 = vmatprep.mubr.bf16.mxu0 %v2130
  %2485 = vmatmul.mubr.bf16.gmra.mrb[0].mxu0 %v2129
  %v2486 = vpop.f32.mrb[0].mxu0
  %v2487 = vadd.f32 %v2326, %v2486
  %v2488 = vpop.f32.mrb[0].mxu0
  %v2489 = vpop.f32.mrb[0].mxu0
  %v2490 = vadd.f32 %v2329, %v2489
  %v2491 = vpop.f32.mrb[0].mxu0
  %2492 = vmatprep.mubr.bf16.mxu0 %v2134
  %2493 = vmatmul.mubr.bf16.gmra.mrb[0].mxu0 %v2133
  %v2494 = vpop.f32.mrb[0].mxu0
  %v2495 = vadd.f32 %v2334, %v2494
  %v2496 = vpop.f32.mrb[0].mxu0
  %v2497 = vpop.f32.mrb[0].mxu0
  %v2498 = vadd.f32 %v2337, %v2497
  %v2499 = vpop.f32.mrb[0].mxu0
  %2500 = vmatprep.mubr.bf16.mxu0 %v2138
  %2501 = vmatmul.mubr.bf16.gmra.mrb[0].mxu0 %v2137
  %v2502 = vpop.f32.mrb[0].mxu0
  %v2503 = vadd.f32 %v2342, %v2502
  %v2504 = vpop.f32.mrb[0].mxu0
  %v2505 = vpop.f32.mrb[0].mxu0
  %v2506 = vadd.f32 %v2345, %v2505
  %v2507 = vpop.f32.mrb[0].mxu0
  %2508 = vmatprep.mubr.bf16.mxu0 %v2142
  %2509 = vmatmul.mubr.bf16.gmra.mrb[0].mxu0 %v2141
  %v2510 = vpop.f32.mrb[0].mxu0
  %v2511 = vadd.f32 %v2350, %v2510
  %v2512 = vpop.f32.mrb[0].mxu0
  %v2513 = vpop.f32.mrb[0].mxu0
  %v2514 = vadd.f32 %v2353, %v2513
  %v2515 = vpop.f32.mrb[0].mxu0
  %2516 = vmatprep.mubr.bf16.mxu0 %v2146
  %2517 = vmatmul.mubr.bf16.gmra.mrb[0].mxu0 %v2145
  %v2518 = vpop.f32.mrb[0].mxu0
  %v2519 = vadd.f32 %v2358, %v2518
  %v2520 = vpop.f32.mrb[0].mxu0
  %v2521 = vpop.f32.mrb[0].mxu0
  %v2522 = vadd.f32 %v2361, %v2521
  %v2523 = vpop.f32.mrb[0].mxu0
  %2524 = vmatprep.mubr.bf16.mxu0 %v2150
  %2525 = vmatmul.mubr.bf16.gmra.mrb[0].mxu0 %v2149
  %v2526 = vpop.f32.mrb[0].mxu0
  %v2527 = vadd.f32 %v2366, %v2526
  %v2528 = vpop.f32.mrb[0].mxu0
  %v2529 = vpop.f32.mrb[0].mxu0
  %v2530 = vadd.f32 %v2369, %v2529
  %v2531 = vpop.f32.mrb[0].mxu0
  %2532 = vmatprep.mubr.bf16.mxu0 %v2154
  %2533 = vmatmul.mubr.bf16.gmra.mrb[0].mxu0 %v2153
  %v2534 = vpop.f32.mrb[0].mxu0
  %v2535 = vadd.f32 %v2374, %v2534
  %v2536 = vpop.f32.mrb[0].mxu0
  %v2537 = vpop.f32.mrb[0].mxu0
  %v2538 = vadd.f32 %v2377, %v2537
  %v2539 = vpop.f32.mrb[0].mxu0
  %2540 = vdwg.mxu0
  %v2541 = vpack.c.bf16 %v2418, %v2415
  %v2542 = vpack.c.bf16 %v2426, %v2423
  %v2543 = vpack.c.bf16 %v2434, %v2431
  %v2544 = vpack.c.bf16 %v2442, %v2439
  %v2545 = vpack.c.bf16 %v2450, %v2447
  %v2546 = vpack.c.bf16 %v2458, %v2455
  %v2547 = vpack.c.bf16 %v2466, %v2463
  %v2548 = vpack.c.bf16 %v2474, %v2471
  %v2549 = vpack.c.bf16 %v2482, %v2479
  %v2550 = vpack.c.bf16 %v2490, %v2487
  %v2551 = vpack.c.bf16 %v2498, %v2495
  %v2552 = vpack.c.bf16 %v2506, %v2503
  %v2553 = vpack.c.bf16 %v2514, %v2511
  %v2554 = vpack.c.bf16 %v2522, %v2519
  %v2555 = vpack.c.bf16 %v2530, %v2527
  %v2556 = vpack.c.bf16 %v2538, %v2535
  %v2557 = vld [vmem:[%s4] sm:$0xf]
  %v2558 = vld [vmem:[%s4 + $0x4] sm:$0xf]
  %v2559 = vld [vmem:[%s4 + $0x8] sm:$0xf]
  %v2560 = vld [vmem:[%s4 + $0xc] sm:$0xf]
  %v2561 = vld [vmem:[%s4 + $0x10] sm:$0xf]
  %v2562 = vld [vmem:[%s4 + $0x14] sm:$0xf]
  %v2563 = vld [vmem:[%s4 + $0x18] sm:$0xf]
  %v2564 = vld [vmem:[%s4 + $0x1c] sm:$0xf]
  %v2565 = vld [vmem:[%s4 + $0x20] sm:$0xf]
  %v2566 = vld [vmem:[%s4 + $0x24] sm:$0xf]
  %v2567 = vld [vmem:[%s4 + $0x28] sm:$0xf]
  %v2568 = vld [vmem:[%s4 + $0x2c] sm:$0xf]
  %v2569 = vld [vmem:[%s4 + $0x30] sm:$0xf]
  %v2570 = vld [vmem:[%s4 + $0x34] sm:$0xf]
  %v2571 = vld [vmem:[%s4 + $0x38] sm:$0xf]
  %v2572 = vld [vmem:[%s4 + $0x3c] sm:$0xf]
  %v2573 = vld [vmem:[%s4 + $0x40] sm:$0xf]
  %v2574 = vld [vmem:[%s4 + $0x44] sm:$0xf]
  %v2575 = vld [vmem:[%s4 + $0x48] sm:$0xf]
  %v2576 = vld [vmem:[%s4 + $0x4c] sm:$0xf]
  %v2577 = vld [vmem:[%s4 + $0x50] sm:$0xf]
  %v2578 = vld [vmem:[%s4 + $0x54] sm:$0xf]
  %v2579 = vld [vmem:[%s4 + $0x58] sm:$0xf]
  %v2580 = vld [vmem:[%s4 + $0x5c] sm:$0xf]
  %v2581 = vld [vmem:[%s4 + $0x60] sm:$0xf]
  %v2582 = vld [vmem:[%s4 + $0x64] sm:$0xf]
  %v2583 = vld [vmem:[%s4 + $0x68] sm:$0xf]
  %v2584 = vld [vmem:[%s4 + $0x6c] sm:$0xf]
  %v2585 = vld [vmem:[%s4 + $0x70] sm:$0xf]
  %v2586 = vld [vmem:[%s4 + $0x74] sm:$0xf]
  %v2587 = vld [vmem:[%s4 + $0x78] sm:$0xf]
  %v2588 = vld [vmem:[%s4 + $0x7c] sm:$0xf]
  %2590 = vset.pattern.permute.xlu0 0
  %2591 = vperm.xlu0 %2590, %v2557
  %v2592 = vpop.permute.xlu0 %2591
  %v2595 = vunpack.c.l.s4 839922192
  %v2596 = vunpack.c.0.s8 %v2595
  %v2597 = vlaneseq
  %v2598 = vshrl.u32 %v2597, 7
  %v2599 = vsub.s32 %v2596, %v2598
  %v2600 = vrot.slane %v2592, %v2599
  %2602 = vset.pattern.permute.xlu0 0
  %2603 = vperm.xlu0 %2602, %v2558
  %v2604 = vpop.permute.xlu0 %2603
  %v2607 = vunpack.c.l.s4 839922192
  %v2608 = vunpack.c.0.s8 %v2607
  %v2609 = vlaneseq
  %v2610 = vshrl.u32 %v2609, 7
  %v2611 = vsub.s32 %v2608, %v2610
  %v2612 = vrot.slane %v2604, %v2611
  %2614 = vset.pattern.permute.xlu0 0
  %2615 = vperm.xlu0 %2614, %v2559
  %v2616 = vpop.permute.xlu0 %2615
  %v2619 = vunpack.c.l.s4 839922192
  %v2620 = vunpack.c.0.s8 %v2619
  %v2621 = vlaneseq
  %v2622 = vshrl.u32 %v2621, 7
  %v2623 = vsub.s32 %v2620, %v2622
  %v2624 = vrot.slane %v2616, %v2623
  %2626 = vset.pattern.permute.xlu0 0
  %2627 = vperm.xlu0 %2626, %v2560
  %v2628 = vpop.permute.xlu0 %2627
  %v2631 = vunpack.c.l.s4 839922192
  %v2632 = vunpack.c.0.s8 %v2631
  %v2633 = vlaneseq
  %v2634 = vshrl.u32 %v2633, 7
  %v2635 = vsub.s32 %v2632, %v2634
  %v2636 = vrot.slane %v2628, %v2635
  %2638 = vset.pattern.permute.xlu0 0
  %2639 = vperm.xlu0 %2638, %v2561
  %v2640 = vpop.permute.xlu0 %2639
  %v2643 = vunpack.c.l.s4 839922192
  %v2644 = vunpack.c.0.s8 %v2643
  %v2645 = vlaneseq
  %v2646 = vshrl.u32 %v2645, 7
  %v2647 = vsub.s32 %v2644, %v2646
  %v2648 = vrot.slane %v2640, %v2647
  %2650 = vset.pattern.permute.xlu0 0
  %2651 = vperm.xlu0 %2650, %v2562
  %v2652 = vpop.permute.xlu0 %2651
  %v2655 = vunpack.c.l.s4 839922192
  %v2656 = vunpack.c.0.s8 %v2655
  %v2657 = vlaneseq
  %v2658 = vshrl.u32 %v2657, 7
  %v2659 = vsub.s32 %v2656, %v2658
  %v2660 = vrot.slane %v2652, %v2659
  %2662 = vset.pattern.permute.xlu0 0
  %2663 = vperm.xlu0 %2662, %v2563
  %v2664 = vpop.permute.xlu0 %2663
  %v2667 = vunpack.c.l.s4 839922192
  %v2668 = vunpack.c.0.s8 %v2667
  %v2669 = vlaneseq
  %v2670 = vshrl.u32 %v2669, 7
  %v2671 = vsub.s32 %v2668, %v2670
  %v2672 = vrot.slane %v2664, %v2671
  %2674 = vset.pattern.permute.xlu0 0
  %2675 = vperm.xlu0 %2674, %v2564
  %v2676 = vpop.permute.xlu0 %2675
  %v2679 = vunpack.c.l.s4 839922192
  %v2680 = vunpack.c.0.s8 %v2679
  %v2681 = vlaneseq
  %v2682 = vshrl.u32 %v2681, 7
  %v2683 = vsub.s32 %v2680, %v2682
  %v2684 = vrot.slane %v2676, %v2683
  %2686 = vset.pattern.permute.xlu0 0
  %2687 = vperm.xlu0 %2686, %v2565
  %v2688 = vpop.permute.xlu0 %2687
  %v2691 = vunpack.c.l.s4 839922192
  %v2692 = vunpack.c.0.s8 %v2691
  %v2693 = vlaneseq
  %v2694 = vshrl.u32 %v2693, 7
  %v2695 = vsub.s32 %v2692, %v2694
  %v2696 = vrot.slane %v2688, %v2695
  %2698 = vset.pattern.permute.xlu0 0
  %2699 = vperm.xlu0 %2698, %v2566
  %v2700 = vpop.permute.xlu0 %2699
  %v2703 = vunpack.c.l.s4 839922192
  %v2704 = vunpack.c.0.s8 %v2703
  %v2705 = vlaneseq
  %v2706 = vshrl.u32 %v2705, 7
  %v2707 = vsub.s32 %v2704, %v2706
  %v2708 = vrot.slane %v2700, %v2707
  %2710 = vset.pattern.permute.xlu0 0
  %2711 = vperm.xlu0 %2710, %v2567
  %v2712 = vpop.permute.xlu0 %2711
  %v2715 = vunpack.c.l.s4 839922192
  %v2716 = vunpack.c.0.s8 %v2715
  %v2717 = vlaneseq
  %v2718 = vshrl.u32 %v2717, 7
  %v2719 = vsub.s32 %v2716, %v2718
  %v2720 = vrot.slane %v2712, %v2719
  %2722 = vset.pattern.permute.xlu0 0
  %2723 = vperm.xlu0 %2722, %v2568
  %v2724 = vpop.permute.xlu0 %2723
  %v2727 = vunpack.c.l.s4 839922192
  %v2728 = vunpack.c.0.s8 %v2727
  %v2729 = vlaneseq
  %v2730 = vshrl.u32 %v2729, 7
  %v2731 = vsub.s32 %v2728, %v2730
  %v2732 = vrot.slane %v2724, %v2731
  %2734 = vset.pattern.permute.xlu0 0
  %2735 = vperm.xlu0 %2734, %v2569
  %v2736 = vpop.permute.xlu0 %2735
  %v2739 = vunpack.c.l.s4 839922192
  %v2740 = vunpack.c.0.s8 %v2739
  %v2741 = vlaneseq
  %v2742 = vshrl.u32 %v2741, 7
  %v2743 = vsub.s32 %v2740, %v2742
  %v2744 = vrot.slane %v2736, %v2743
  %2746 = vset.pattern.permute.xlu0 0
  %2747 = vperm.xlu0 %2746, %v2570
  %v2748 = vpop.permute.xlu0 %2747
  %v2751 = vunpack.c.l.s4 839922192
  %v2752 = vunpack.c.0.s8 %v2751
  %v2753 = vlaneseq
  %v2754 = vshrl.u32 %v2753, 7
  %v2755 = vsub.s32 %v2752, %v2754
  %v2756 = vrot.slane %v2748, %v2755
  %2758 = vset.pattern.permute.xlu0 0
  %2759 = vperm.xlu0 %2758, %v2571
  %v2760 = vpop.permute.xlu0 %2759
  %v2763 = vunpack.c.l.s4 839922192
  %v2764 = vunpack.c.0.s8 %v2763
  %v2765 = vlaneseq
  %v2766 = vshrl.u32 %v2765, 7
  %v2767 = vsub.s32 %v2764, %v2766
  %v2768 = vrot.slane %v2760, %v2767
  %2770 = vset.pattern.permute.xlu0 0
  %2771 = vperm.xlu0 %2770, %v2572
  %v2772 = vpop.permute.xlu0 %2771
  %v2775 = vunpack.c.l.s4 839922192
  %v2776 = vunpack.c.0.s8 %v2775
  %v2777 = vlaneseq
  %v2778 = vshrl.u32 %v2777, 7
  %v2779 = vsub.s32 %v2776, %v2778
  %v2780 = vrot.slane %v2772, %v2779
  %2782 = vset.pattern.permute.xlu0 0
  %2783 = vperm.xlu0 %2782, %v2573
  %v2784 = vpop.permute.xlu0 %2783
  %v2787 = vunpack.c.l.s4 839922192
  %v2788 = vunpack.c.0.s8 %v2787
  %v2789 = vlaneseq
  %v2790 = vshrl.u32 %v2789, 7
  %v2791 = vsub.s32 %v2788, %v2790
  %v2792 = vrot.slane %v2784, %v2791
  %2794 = vset.pattern.permute.xlu0 0
  %2795 = vperm.xlu0 %2794, %v2574
  %v2796 = vpop.permute.xlu0 %2795
  %v2799 = vunpack.c.l.s4 839922192
  %v2800 = vunpack.c.0.s8 %v2799
  %v2801 = vlaneseq
  %v2802 = vshrl.u32 %v2801, 7
  %v2803 = vsub.s32 %v2800, %v2802
  %v2804 = vrot.slane %v2796, %v2803
  %2806 = vset.pattern.permute.xlu0 0
  %2807 = vperm.xlu0 %2806, %v2575
  %v2808 = vpop.permute.xlu0 %2807
  %v2811 = vunpack.c.l.s4 839922192
  %v2812 = vunpack.c.0.s8 %v2811
  %v2813 = vlaneseq
  %v2814 = vshrl.u32 %v2813, 7
  %v2815 = vsub.s32 %v2812, %v2814
  %v2816 = vrot.slane %v2808, %v2815
  %2818 = vset.pattern.permute.xlu0 0
  %2819 = vperm.xlu0 %2818, %v2576
  %v2820 = vpop.permute.xlu0 %2819
  %v2823 = vunpack.c.l.s4 839922192
  %v2824 = vunpack.c.0.s8 %v2823
  %v2825 = vlaneseq
  %v2826 = vshrl.u32 %v2825, 7
  %v2827 = vsub.s32 %v2824, %v2826
  %v2828 = vrot.slane %v2820, %v2827
  %2830 = vset.pattern.permute.xlu0 0
  %2831 = vperm.xlu0 %2830, %v2577
  %v2832 = vpop.permute.xlu0 %2831
  %v2835 = vunpack.c.l.s4 839922192
  %v2836 = vunpack.c.0.s8 %v2835
  %v2837 = vlaneseq
  %v2838 = vshrl.u32 %v2837, 7
  %v2839 = vsub.s32 %v2836, %v2838
  %v2840 = vrot.slane %v2832, %v2839
  %2842 = vset.pattern.permute.xlu0 0
  %2843 = vperm.xlu0 %2842, %v2578
  %v2844 = vpop.permute.xlu0 %2843
  %v2847 = vunpack.c.l.s4 839922192
  %v2848 = vunpack.c.0.s8 %v2847
  %v2849 = vlaneseq
  %v2850 = vshrl.u32 %v2849, 7
  %v2851 = vsub.s32 %v2848, %v2850
  %v2852 = vrot.slane %v2844, %v2851
  %2854 = vset.pattern.permute.xlu0 0
  %2855 = vperm.xlu0 %2854, %v2579
  %v2856 = vpop.permute.xlu0 %2855
  %v2859 = vunpack.c.l.s4 839922192
  %v2860 = vunpack.c.0.s8 %v2859
  %v2861 = vlaneseq
  %v2862 = vshrl.u32 %v2861, 7
  %v2863 = vsub.s32 %v2860, %v2862
  %v2864 = vrot.slane %v2856, %v2863
  %2866 = vset.pattern.permute.xlu0 0
  %2867 = vperm.xlu0 %2866, %v2580
  %v2868 = vpop.permute.xlu0 %2867
  %v2871 = vunpack.c.l.s4 839922192
  %v2872 = vunpack.c.0.s8 %v2871
  %v2873 = vlaneseq
  %v2874 = vshrl.u32 %v2873, 7
  %v2875 = vsub.s32 %v2872, %v2874
  %v2876 = vrot.slane %v2868, %v2875
  %2878 = vset.pattern.permute.xlu0 0
  %2879 = vperm.xlu0 %2878, %v2581
  %v2880 = vpop.permute.xlu0 %2879
  %v2883 = vunpack.c.l.s4 839922192
  %v2884 = vunpack.c.0.s8 %v2883
  %v2885 = vlaneseq
  %v2886 = vshrl.u32 %v2885, 7
  %v2887 = vsub.s32 %v2884, %v2886
  %v2888 = vrot.slane %v2880, %v2887
  %2890 = vset.pattern.permute.xlu0 0
  %2891 = vperm.xlu0 %2890, %v2582
  %v2892 = vpop.permute.xlu0 %2891
  %v2895 = vunpack.c.l.s4 839922192
  %v2896 = vunpack.c.0.s8 %v2895
  %v2897 = vlaneseq
  %v2898 = vshrl.u32 %v2897, 7
  %v2899 = vsub.s32 %v2896, %v2898
  %v2900 = vrot.slane %v2892, %v2899
  %2902 = vset.pattern.permute.xlu0 0
  %2903 = vperm.xlu0 %2902, %v2583
  %v2904 = vpop.permute.xlu0 %2903
  %v2907 = vunpack.c.l.s4 839922192
  %v2908 = vunpack.c.0.s8 %v2907
  %v2909 = vlaneseq
  %v2910 = vshrl.u32 %v2909, 7
  %v2911 = vsub.s32 %v2908, %v2910
  %v2912 = vrot.slane %v2904, %v2911
  %2914 = vset.pattern.permute.xlu0 0
  %2915 = vperm.xlu0 %2914, %v2584
  %v2916 = vpop.permute.xlu0 %2915
  %v2919 = vunpack.c.l.s4 839922192
  %v2920 = vunpack.c.0.s8 %v2919
  %v2921 = vlaneseq
  %v2922 = vshrl.u32 %v2921, 7
  %v2923 = vsub.s32 %v2920, %v2922
  %v2924 = vrot.slane %v2916, %v2923
  %2926 = vset.pattern.permute.xlu0 0
  %2927 = vperm.xlu0 %2926, %v2585
  %v2928 = vpop.permute.xlu0 %2927
  %v2931 = vunpack.c.l.s4 839922192
  %v2932 = vunpack.c.0.s8 %v2931
  %v2933 = vlaneseq
  %v2934 = vshrl.u32 %v2933, 7
  %v2935 = vsub.s32 %v2932, %v2934
  %v2936 = vrot.slane %v2928, %v2935
  %2938 = vset.pattern.permute.xlu0 0
  %2939 = vperm.xlu0 %2938, %v2586
  %v2940 = vpop.permute.xlu0 %2939
  %v2943 = vunpack.c.l.s4 839922192
  %v2944 = vunpack.c.0.s8 %v2943
  %v2945 = vlaneseq
  %v2946 = vshrl.u32 %v2945, 7
  %v2947 = vsub.s32 %v2944, %v2946
  %v2948 = vrot.slane %v2940, %v2947
  %2950 = vset.pattern.permute.xlu0 0
  %2951 = vperm.xlu0 %2950, %v2587
  %v2952 = vpop.permute.xlu0 %2951
  %v2955 = vunpack.c.l.s4 839922192
  %v2956 = vunpack.c.0.s8 %v2955
  %v2957 = vlaneseq
  %v2958 = vshrl.u32 %v2957, 7
  %v2959 = vsub.s32 %v2956, %v2958
  %v2960 = vrot.slane %v2952, %v2959
  %2962 = vset.pattern.permute.xlu0 0
  %2963 = vperm.xlu0 %2962, %v2588
  %v2964 = vpop.permute.xlu0 %2963
  %v2967 = vunpack.c.l.s4 839922192
  %v2968 = vunpack.c.0.s8 %v2967
  %v2969 = vlaneseq
  %v2970 = vshrl.u32 %v2969, 7
  %v2971 = vsub.s32 %v2968, %v2970
  %v2972 = vrot.slane %v2964, %v2971
  %v3005 = vunpack.c.l.b16 %v2600
  %v3006 = vunpack.c.l.b16 %v2612
  %v3007 = vunpack.c.l.b16 %v2624
  %v3008 = vunpack.c.l.b16 %v2636
  %v3009 = vunpack.c.l.b16 %v2648
  %v3010 = vunpack.c.l.b16 %v2660
  %v3011 = vunpack.c.l.b16 %v2672
  %v3012 = vunpack.c.l.b16 %v2684
  %v3013 = vunpack.c.l.b16 %v2696
  %v3014 = vunpack.c.l.b16 %v2708
  %v3015 = vunpack.c.l.b16 %v2720
  %v3016 = vunpack.c.l.b16 %v2732
  %v3017 = vunpack.c.l.b16 %v2744
  %v3018 = vunpack.c.l.b16 %v2756
  %v3019 = vunpack.c.l.b16 %v2768
  %v3020 = vunpack.c.l.b16 %v2780
  %v3021 = vunpack.c.l.b16 %v2792
  %v3022 = vunpack.c.l.b16 %v2804
  %v3023 = vunpack.c.l.b16 %v2816
  %v3024 = vunpack.c.l.b16 %v2828
  %v3025 = vunpack.c.l.b16 %v2840
  %v3026 = vunpack.c.l.b16 %v2852
  %v3027 = vunpack.c.l.b16 %v2864
  %v3028 = vunpack.c.l.b16 %v2876
  %v3029 = vunpack.c.l.b16 %v2888
  %v3030 = vunpack.c.l.b16 %v2900
  %v3031 = vunpack.c.l.b16 %v2912
  %v3032 = vunpack.c.l.b16 %v2924
  %v3033 = vunpack.c.l.b16 %v2936
  %v3034 = vunpack.c.l.b16 %v2948
  %v3035 = vunpack.c.l.b16 %v2960
  %v3036 = vunpack.c.l.b16 %v2972
  %v3037 = vpack.c.b16 %v3006, %v3005
  %v3038 = vpack.c.b16 %v3008, %v3007
  %v3039 = vpack.c.b16 %v3010, %v3009
  %v3040 = vpack.c.b16 %v3012, %v3011
  %v3041 = vpack.c.b16 %v3014, %v3013
  %v3042 = vpack.c.b16 %v3016, %v3015
  %v3043 = vpack.c.b16 %v3018, %v3017
  %v3044 = vpack.c.b16 %v3020, %v3019
  %v3045 = vpack.c.b16 %v3022, %v3021
  %v3046 = vpack.c.b16 %v3024, %v3023
  %v3047 = vpack.c.b16 %v3026, %v3025
  %v3048 = vpack.c.b16 %v3028, %v3027
  %v3049 = vpack.c.b16 %v3030, %v3029
  %v3050 = vpack.c.b16 %v3032, %v3031
  %v3051 = vpack.c.b16 %v3034, %v3033
  %v3052 = vpack.c.b16 %v3036, %v3035
  %v3069 = vadd.bf16 %v2541, %v3037
  %v3070 = vadd.bf16 %v2542, %v3038
  %v3071 = vadd.bf16 %v2543, %v3039
  %v3072 = vadd.bf16 %v2544, %v3040
  %v3073 = vadd.bf16 %v2545, %v3041
  %v3074 = vadd.bf16 %v2546, %v3042
  %v3075 = vadd.bf16 %v2547, %v3043
  %v3076 = vadd.bf16 %v2548, %v3044
  %v3077 = vadd.bf16 %v2549, %v3045
  %v3078 = vadd.bf16 %v2550, %v3046
  %v3079 = vadd.bf16 %v2551, %v3047
  %v3080 = vadd.bf16 %v2552, %v3048
  %v3081 = vadd.bf16 %v2553, %v3049
  %v3082 = vadd.bf16 %v2554, %v3050
  %v3083 = vadd.bf16 %v2555, %v3051
  %v3084 = vadd.bf16 %v2556, %v3052
  %vm3085 = vcmp.gt.bf16.partialorder %v3069, 0
  %vm3086 = vcmp.gt.bf16.partialorder %v3070, 0
  %vm3087 = vcmp.gt.bf16.partialorder %v3071, 0
  %vm3088 = vcmp.gt.bf16.partialorder %v3072, 0
  %vm3089 = vcmp.gt.bf16.partialorder %v3073, 0
  %vm3090 = vcmp.gt.bf16.partialorder %v3074, 0
  %vm3091 = vcmp.gt.bf16.partialorder %v3075, 0
  %vm3092 = vcmp.gt.bf16.partialorder %v3076, 0
  %vm3093 = vcmp.gt.bf16.partialorder %v3077, 0
  %vm3094 = vcmp.gt.bf16.partialorder %v3078, 0
  %vm3095 = vcmp.gt.bf16.partialorder %v3079, 0
  %vm3096 = vcmp.gt.bf16.partialorder %v3080, 0
  %vm3097 = vcmp.gt.bf16.partialorder %v3081, 0
  %vm3098 = vcmp.gt.bf16.partialorder %v3082, 0
  %vm3099 = vcmp.gt.bf16.partialorder %v3083, 0
  %vm3100 = vcmp.gt.bf16.partialorder %v3084, 0
  %v3101 = vmul.bf16 %v3069, 1045249613
  %v3102 = vmul.bf16 %v3070, 1045249613
  %v3103 = vmul.bf16 %v3071, 1045249613
  %v3104 = vmul.bf16 %v3072, 1045249613
  %v3105 = vmul.bf16 %v3073, 1045249613
  %v3106 = vmul.bf16 %v3074, 1045249613
  %v3107 = vmul.bf16 %v3075, 1045249613
  %v3108 = vmul.bf16 %v3076, 1045249613
  %v3109 = vmul.bf16 %v3077, 1045249613
  %v3110 = vmul.bf16 %v3078, 1045249613
  %v3111 = vmul.bf16 %v3079, 1045249613
  %v3112 = vmul.bf16 %v3080, 1045249613
  %v3113 = vmul.bf16 %v3081, 1045249613
  %v3114 = vmul.bf16 %v3082, 1045249613
  %v3115 = vmul.bf16 %v3083, 1045249613
  %v3116 = vmul.bf16 %v3084, 1045249613
  %v3117 = vsel %vm3085, %v3069, %v3101
  %v3118 = vsel %vm3086, %v3070, %v3102
  %v3119 = vsel %vm3087, %v3071, %v3103
  %v3120 = vsel %vm3088, %v3072, %v3104
  %v3121 = vsel %vm3089, %v3073, %v3105
  %v3122 = vsel %vm3090, %v3074, %v3106
  %v3123 = vsel %vm3091, %v3075, %v3107
  %v3124 = vsel %vm3092, %v3076, %v3108
  %v3125 = vsel %vm3093, %v3077, %v3109
  %v3126 = vsel %vm3094, %v3078, %v3110
  %v3127 = vsel %vm3095, %v3079, %v3111
  %v3128 = vsel %vm3096, %v3080, %v3112
  %v3129 = vsel %vm3097, %v3081, %v3113
  %v3130 = vsel %vm3098, %v3082, %v3114
  %v3131 = vsel %vm3099, %v3083, %v3115
  %v3132 = vsel %vm3100, %v3084, %v3116
  %v3133 = vld [vmem:[%s5] sm:$0x3]
  %v3134 = vld [vmem:[#allocation2] sm:$0x1]
  %3136 = vset.pattern.permute.xlu0 0
  %3137 = vperm.xlu0 %3136, %v3134
  %v3138 = vpop.permute.xlu0 %3137
  %v3140 = vlaneseq
  %v3141 = vshrl.u32 %v3140, 7
  %v3142 = vsub.s32 0, %v3141
  %v3143 = vrot.slane %v3138, %v3142
  %v3146 = vunpack.c.l.s4 1966171168
  %v3147 = vunpack.c.0.s8 %v3146
  %v3148 = vlaneseq
  %v3149 = vshrl.u32 %v3148, 7
  %v3150 = vsub.s32 %v3147, %v3149
  %v3151 = vrot.slane %v3133, %v3150
  %v3152 = vcombine.high %v3151, %v3151
  %v3154 = vunpack.c.l.s4 1966171168
  %v3155 = vunpack.c.0.s8 %v3154
  %v3156 = vlaneseq
  %v3157 = vshrl.u32 %v3156, 7
  %v3158 = vsub.s32 %v3155, %v3157
  %v3159 = vrot.slane %v3151, %v3158
  %v3161 = vunpack.c.l.s4 1966171168
  %v3162 = vunpack.c.0.s8 %v3161
  %v3163 = vlaneseq
  %v3164 = vshrl.u32 %v3163, 7
  %v3165 = vsub.s32 %v3162, %v3164
  %v3166 = vrot.slane %v3152, %v3165
  %3169 = vmatprep.subr.bf16.mxu0 0
  %3170 = vmatpush1.bf16.msra.mxu0 %v3117
  %3171 = vmatprep.subr.bf16.mxu0 0
  %3172 = vmatpush1.bf16.msra.mxu0 %v3118
  %3173 = vmatprep.subr.bf16.mxu0 0
  %3174 = vmatpush1.bf16.msra.mxu0 %v3119
  %3175 = vmatprep.subr.bf16.mxu0 0
  %3176 = vmatpush1.bf16.msra.mxu0 %v3120
  %3177 = vmatprep.subr.bf16.mxu0 0
  %3178 = vmatpush1.bf16.msra.mxu0 %v3121
  %3179 = vmatprep.subr.bf16.mxu0 0
  %3180 = vmatpush1.bf16.msra.mxu0 %v3122
  %3181 = vmatprep.subr.bf16.mxu0 0
  %3182 = vmatpush1.bf16.msra.mxu0 %v3123
  %3183 = vmatprep.subr.bf16.mxu0 0
  %3184 = vmatpush1.bf16.msra.mxu0 %v3124
  %3185 = vmatprep.subr.bf16.mxu0 0
  %3186 = vmatpush1.bf16.msra.mxu0 %v3125
  %3187 = vmatprep.subr.bf16.mxu0 0
  %3188 = vmatpush1.bf16.msra.mxu0 %v3126
  %3189 = vmatprep.subr.bf16.mxu0 0
  %3190 = vmatpush1.bf16.msra.mxu0 %v3127
  %3191 = vmatprep.subr.bf16.mxu0 0
  %3192 = vmatpush1.bf16.msra.mxu0 %v3128
  %3193 = vmatprep.subr.bf16.mxu0 0
  %3194 = vmatpush1.bf16.msra.mxu0 %v3129
  %3195 = vmatprep.subr.bf16.mxu0 0
  %3196 = vmatpush1.bf16.msra.mxu0 %v3130
  %3197 = vmatprep.subr.bf16.mxu0 0
  %3198 = vmatpush1.bf16.msra.mxu0 %v3131
  %3199 = vmatprep.subr.bf16.mxu0 0
  %3200 = vmatpush1.bf16.msra.mxu0 %v3132
  %3201 = vmatprep.mubr.bf16.mxu0 %v3166
  %3202 = vmatmul.mubr.bf16.gmra.mrb[0].mxu0 %v3159
  %v3203 = vpop.f32.mrb[0].mxu0
  %v3204 = vadd.f32 %v3143, %v3203
  %v3205 = vpop.f32.mrb[0].mxu0
  %v3206 = vpop.f32.mrb[0].mxu0
  %v3207 = vpop.f32.mrb[0].mxu0
  %3208 = vdwg.mxu0
  %v3209 = vand.u32 2147483647, %v3204
  %v3210 = vsub.f32 0.0, %v3209
  %v3211 = vmul.f32 %v3210, 1.442695
  %v3212 = vpow.pop %v3211
  %v3213 = vadd.f32 %v3212, 1.0
  %v3214 = vrcp.pop %v3213
  %vm3215 = vcmp.ge.f32.partialorder %v3204, 0.0
  %v3216 = vmul.f32 %v3212, %v3214
  %v3217 = vsel %vm3215, %v3214, %v3216
  %3218 = vst [vmem:[%s7] sm:$0x1] %v3217
  // Predicated region
  $region30: #{_discriminator_forward_impl.1} parent=0 // pred_check
    _
  $region31: #{_discriminator_forward_impl.1} parent=0 // pred_check_branch
    %3220 = sbr.rel (0) target = $region33
  $region32: #{_discriminator_forward_impl.1} parent=0 // pred_region
    _
  $region33: #{_discriminator_forward_impl.1} parent=0 // pred_fallthru
    _
  // Predicated region
  $region34: #{_discriminator_forward_impl.1} parent=0 // pred_check
    _
  $region35: #{_discriminator_forward_impl.1} parent=0 // pred_check_branch
    %3222 = sbr.rel (0) target = $region37
  $region36: #{_discriminator_forward_impl.1} parent=0 // pred_region
    _
  $region37: #{_discriminator_forward_impl.1} parent=0 // pred_fallthru
    _

</llo_original>
